<compile_context>
chip_gen: v5e
topology: v5e:2x2
jax: 0.10.0
libtpu: 0.0.40
codegen_flags: <defaults>
</compile_context>

<pallas_src>
import jax
import jax.numpy as jnp
from jax.experimental import pallas as pl
from jax.experimental.pallas import tpu as pltpu


# ------------------------------ Pallas kernel -------------------------------

def _conv_relu_pool(x, w_ref, b_ref):
    """Fused conv(k=5, VALID) + bias + ReLU + 2x2 max-pool.

    x:     (H_in, TB, F) f32 value, lanes F = W_in*C_in laid out as w*C_in + c.
    w_ref: (2, K, F, N) repacked weights, N = (W_out//2)*C_out; index 0/1 is the
           even/odd column parity of the conv output (the horizontal pool pair).
    b_ref: (1, N) bias tiled over pooled width.
    returns (H_out//2, TB, N) with lanes laid out as w_pooled*C_out + c.
    """
    k = w_ref.shape[1]
    h_in, tb, f = x.shape
    n = w_ref.shape[3]
    h_out = h_in - k + 1
    assert h_out % 2 == 0

    acc_e = jnp.zeros((h_out * tb, n), jnp.float32)
    acc_o = jnp.zeros((h_out * tb, n), jnp.float32)
    for di in range(k):
        xs = x[di:di + h_out].reshape(h_out * tb, f)        # layout-preserving
        acc_e = acc_e + jnp.dot(xs, w_ref[0, di], preferred_element_type=jnp.float32)
        acc_o = acc_o + jnp.dot(xs, w_ref[1, di], preferred_element_type=jnp.float32)

    # bias + horizontal (W) max-pool + ReLU, all fused on the matmul results.
    y = jnp.maximum(jnp.maximum(acc_e, acc_o) + b_ref[...], 0.0)
    # vertical (H) max-pool: rows are (h, b) with b fastest -> major-dim reshape.
    y = y.reshape(h_out // 2, 2, tb, n)
    return jnp.maximum(y[:, 0], y[:, 1])                     # (H_out//2, TB, N)


def _net_kernel(x_ref, w1_ref, b1_ref, w2_ref, b2_ref,
                wf1_ref, bf1_ref, wf2_ref, bf2_ref, out_ref):
    tb = x_ref.shape[1]

    h1 = _conv_relu_pool(x_ref[...], w1_ref, b1_ref)         # (12, TB, 12*10)
    # conv2_drop (Dropout2d) is identity in inference mode.
    h2 = _conv_relu_pool(h1, w2_ref, b2_ref)                 # (4,  TB, 4*20)

    # fc1: the NCHW-flatten permutation is folded into wf1 (4, 80, 50); contract
    # the pooled-H dim with 4 accumulated matmuls (no activation transpose needed).
    acc = jnp.zeros((tb, bf1_ref.shape[1]), jnp.float32)
    for hh in range(h2.shape[0]):
        acc = acc + jnp.dot(h2[hh], wf1_ref[hh], preferred_element_type=jnp.float32)
    hid = jnp.maximum(acc + bf1_ref[...], 0.0)               # (TB, 50)
    # F.dropout(training=False) is identity in inference mode.

    logits = jnp.dot(hid, wf2_ref[...], preferred_element_type=jnp.float32) + bf2_ref[...]
    m = jnp.max(logits, axis=-1, keepdims=True)
    z = logits - m
    lse = jnp.log(jnp.sum(jnp.exp(z), axis=-1, keepdims=True))
    out_ref[...] = z - lse                                   # (TB, 10) log-probs


# --------------------------- weight repacking (glue) -------------------------

def _conv_pool_weight(w, w_in):
    """Fold VALID kxk conv + horizontal 2x-pool parity split into one matrix.

    Returns (2, K, W_in*C_in, W_p*C_out) with
      out[q, di, col*Cin+ci, wp*Cout+co] = w[co, ci, di, col - (2*wp+q)]
    when that tap lies inside the kernel window, else 0.
    """
    cout, cin, k, _ = w.shape
    w_out = w_in - k + 1
    w_p = w_out // 2
    q = jnp.arange(2).reshape(2, 1, 1, 1, 1, 1)
    di = jnp.arange(k).reshape(1, k, 1, 1, 1, 1)
    col = jnp.arange(w_in).reshape(1, 1, w_in, 1, 1, 1)
    ci = jnp.arange(cin).reshape(1, 1, 1, cin, 1, 1)
    wp = jnp.arange(w_p).reshape(1, 1, 1, 1, w_p, 1)
    co = jnp.arange(cout).reshape(1, 1, 1, 1, 1, cout)
    dj = col - (2 * wp + q)
    valid = (dj >= 0) & (dj < k)
    vals = jnp.where(valid, w[co, ci, di, jnp.clip(dj, 0, k - 1)], 0.0)
    return vals.reshape(2, k, w_in * cin, w_p * cout).astype(jnp.float32)


def _fc1_weight(fc1_w):
    """(50, 320) torch fc1 weight -> (4, 80, 50): [h, w*20+c, o] = fc1_w[o, c*16+h*4+w]."""
    h = jnp.arange(4).reshape(4, 1, 1, 1)
    w = jnp.arange(4).reshape(1, 4, 1, 1)
    c = jnp.arange(20).reshape(1, 1, 20, 1)
    o = jnp.arange(fc1_w.shape[0]).reshape(1, 1, 1, -1)
    perm = fc1_w[o, c * 16 + h * 4 + w]                      # (4, 4, 20, 50)
    return perm.reshape(4, 80, fc1_w.shape[0]).astype(jnp.float32)


def _resident_spec(arr):
    nd = arr.ndim
    return pl.BlockSpec(arr.shape, lambda g, _nd=nd: (0,) * _nd)


# --------------------------------- wrapper -----------------------------------

def net_forward(params, x_nchw, block_batch=8):
    """Inference forward of `Net`.  block_batch (multiple of 8) images per grid step;
    raise it (e.g. 32/64) to amortize per-step overhead at large batch sizes."""
    b, cin, hh, ww = x_nchw.shape
    assert (cin, hh, ww) == (1, 28, 28), "Net requires (B, 1, 28, 28) inputs"
    assert block_batch % 8 == 0
    tb = block_batch

    # One-time weight repacking (conv+pool folded matrices, flatten-folded fc1).
    w1p = _conv_pool_weight(params["conv1_w"], 28)            # (2, 5, 28, 120)
    b1p = jnp.tile(params["conv1_b"].astype(jnp.float32), 12).reshape(1, 120)
    w2p = _conv_pool_weight(params["conv2_w"], 12)            # (2, 5, 120, 80)
    b2p = jnp.tile(params["conv2_b"].astype(jnp.float32), 4).reshape(1, 80)
    wf1 = _fc1_weight(params["fc1_w"])                        # (4, 80, 50)
    bf1 = params["fc1_b"].astype(jnp.float32).reshape(1, -1)
    wf2 = params["fc2_w"].T.astype(jnp.float32)               # (50, 10)
    bf2 = params["fc2_b"].astype(jnp.float32).reshape(1, -1)

    # (B,1,28,28) -> (28, B, 28): batch on the sublane axis so both pooled spatial
    # dims stay major inside the kernel.  Pad batch to a multiple of the block.
    xg = jnp.transpose(x_nchw.reshape(b, 28, 28).astype(jnp.float32), (1, 0, 2))
    bp = ((b + tb - 1) // tb) * tb
    if bp != b:
        xg = jnp.pad(xg, ((0, 0), (0, bp - b), (0, 0)))

    out = pl.pallas_call(
        _net_kernel,
        out_shape=jax.ShapeDtypeStruct((bp, 10), jnp.float32),
        grid_spec=pltpu.PrefetchScalarGridSpec(
            num_scalar_prefetch=0,
            grid=(bp // tb,),
            in_specs=[
                pl.BlockSpec((28, tb, 28), lambda g: (0, g, 0)),
                _resident_spec(w1p), _resident_spec(b1p),
                _resident_spec(w2p), _resident_spec(b2p),
                _resident_spec(wf1), _resident_spec(bf1),
                _resident_spec(wf2), _resident_spec(bf2),
            ],
            out_specs=pl.BlockSpec((tb, 10), lambda g: (g, 0)),
        ),
        compiler_params=pltpu.CompilerParams(
            dimension_semantics=("parallel",),
        ),
    )(xg, w1p, b1p, w2p, b2p, wf1, bf1, wf2, bf2)
    return out[:b]


# ------------------------------ reference & init ------------------------------

def _reference_forward(params, x):
    hi = jax.lax.Precision.HIGHEST

    def conv(x, w, bias):
        y = jax.lax.conv_general_dilated(
            x, w, window_strides=(1, 1), padding="VALID",
            dimension_numbers=("NCHW", "OIHW", "NCHW"), precision=hi)
        return y + bias[None, :, None, None]

    def pool(x):
        return jax.lax.reduce_window(x, -jnp.inf, jax.lax.max,
                                     (1, 1, 2, 2), (1, 1, 2, 2), "VALID")

    x = jax.nn.relu(pool(conv(x, params["conv1_w"], params["conv1_b"])))
    x = jax.nn.relu(pool(conv(x, params["conv2_w"], params["conv2_b"])))
    x = x.reshape(x.shape[0], 320)
    x = jax.nn.relu(jnp.dot(x, params["fc1_w"].T, precision=hi) + params["fc1_b"])
    x = jnp.dot(x, params["fc2_w"].T, precision=hi) + params["fc2_b"]
    return jax.nn.log_softmax(x, axis=-1)


def init_params(key):
    ks = jax.random.split(key, 8)

    def u(k, shape, fan_in):
        bound = 1.0 / jnp.sqrt(jnp.float32(fan_in))
        return jax.random.uniform(k, shape, jnp.float32, -bound, bound)

    return {
        "conv1_w": u(ks[0], (10, 1, 5, 5), 1 * 25),
        "conv1_b": u(ks[1], (10,), 1 * 25),
        "conv2_w": u(ks[2], (20, 10, 5, 5), 10 * 25),
        "conv2_b": u(ks[3], (20,), 10 * 25),
        "fc1_w": u(ks[4], (50, 320), 320),
        "fc1_b": u(ks[5], (50,), 320),
        "fc2_w": u(ks[6], (10, 50), 50),
        "fc2_b": u(ks[7], (10,), 50),
    }


if __name__ == "__main__":
    key = jax.random.PRNGKey(0)
    pkey, xkey = jax.random.split(key)
    params = init_params(pkey)

    fwd = jax.jit(net_forward)

    # Small batch (pads up to one block).
    x = jax.random.normal(xkey, (2, 1, 28, 28), jnp.float32)
    out = jax.block_until_ready(fwd(params, x))
    assert out.shape == (2, 10)
    assert bool(jnp.all(jnp.isfinite(out)))
    ref = _reference_forward(params, x)
    assert bool(jnp.allclose(out, ref, atol=1e-3, rtol=1e-3)), (
        "max abs err %e" % float(jnp.max(jnp.abs(out - ref))))

    # Larger, non-multiple-of-block batch: exercises the batch grid + padding path.
    x2 = jax.random.normal(jax.random.PRNGKey(1), (13, 1, 28, 28), jnp.float32)
    out2 = jax.block_until_ready(fwd(params, x2))
    ref2 = _reference_forward(params, x2)
    assert out2.shape == (13, 10)
    assert bool(jnp.allclose(out2, ref2, atol=1e-3, rtol=1e-3))

    print("KERNEL_OK")
</pallas_src>

<mosaic_0001>
module attributes {stable_mosaic.version = 11 : i64} {
  func.func @_net_kernel(%arg0: i32, %arg1: memref<28x8x28xf32, #tpu.memory_space<vmem>>, %arg2: memref<2x5x28x120xf32, #tpu.memory_space<vmem>>, %arg3: memref<1x120xf32, #tpu.memory_space<vmem>>, %arg4: memref<2x5x120x80xf32, #tpu.memory_space<vmem>>, %arg5: memref<1x80xf32, #tpu.memory_space<vmem>>, %arg6: memref<4x80x50xf32, #tpu.memory_space<vmem>>, %arg7: memref<1x50xf32, #tpu.memory_space<vmem>>, %arg8: memref<50x10xf32, #tpu.memory_space<vmem>>, %arg9: memref<1x10xf32, #tpu.memory_space<vmem>>, %arg10: memref<8x10xf32, #tpu.memory_space<vmem>>) attributes {dimension_semantics = [#tpu.dimension_semantics<parallel>], iteration_bounds = array<i64: 1>, scalar_prefetch = 0 : i64, scratch_operands = 0 : i64, tpu.core_type = #tpu.core_type<tc>, window_params = [{transform_indices = @transform_0, window_bounds = array<i64: 28, 8, 28>}, {pipeline_mode = #tpu.pipeline_mode<synchronous>, transform_indices = @transform_1, window_bounds = array<i64: 2, 5, 28, 120>}, {pipeline_mode = #tpu.pipeline_mode<synchronous>, transform_indices = @transform_2, window_bounds = array<i64: 1, 120>}, {pipeline_mode = #tpu.pipeline_mode<synchronous>, transform_indices = @transform_3, window_bounds = array<i64: 2, 5, 120, 80>}, {pipeline_mode = #tpu.pipeline_mode<synchronous>, transform_indices = @transform_4, window_bounds = array<i64: 1, 80>}, {pipeline_mode = #tpu.pipeline_mode<synchronous>, transform_indices = @transform_5, window_bounds = array<i64: 4, 80, 50>}, {pipeline_mode = #tpu.pipeline_mode<synchronous>, transform_indices = @transform_6, window_bounds = array<i64: 1, 50>}, {pipeline_mode = #tpu.pipeline_mode<synchronous>, transform_indices = @transform_7, window_bounds = array<i64: 50, 10>}, {pipeline_mode = #tpu.pipeline_mode<synchronous>, transform_indices = @transform_8, window_bounds = array<i64: 1, 10>}, {transform_indices = @transform_9, window_bounds = array<i64: 8, 10>}]} {
    %c0 = arith.constant 0 : index
    %c0_0 = arith.constant 0 : index
    %c0_1 = arith.constant 0 : index
    %0 = vector.load %arg1[%c0, %c0_0, %c0_1] : memref<28x8x28xf32, #tpu.memory_space<vmem>>, vector<28x8x28xf32>
    %cst = arith.constant 0.000000e+00 : f32
    %1 = vector.broadcast %cst : f32 to vector<192x120xf32>
    %cst_2 = arith.constant 0.000000e+00 : f32
    %2 = vector.broadcast %cst_2 : f32 to vector<192x120xf32>
    %3 = vector.extract_strided_slice %0 {offsets = [0, 0, 0], sizes = [24, 8, 28], strides = [1, 1, 1]} : vector<28x8x28xf32> to vector<24x8x28xf32>
    %4 = vector.shape_cast %3 : vector<24x8x28xf32> to vector<192x28xf32>
    %c0_3 = arith.constant 0 : index
    %c0_4 = arith.constant 0 : index
    %c0_5 = arith.constant 0 : index
    %c0_6 = arith.constant 0 : index
    %5 = vector.load %arg2[%c0_3, %c0_4, %c0_5, %c0_6] : memref<2x5x28x120xf32, #tpu.memory_space<vmem>>, vector<1x1x28x120xf32>
    %6 = vector.shape_cast %5 : vector<1x1x28x120xf32> to vector<28x120xf32>
    %cst_7 = arith.constant dense<0.000000e+00> : vector<192x120xf32>
    %7 = tpu.matmul %4, %6, %cst_7 {dimension_numbers = #tpu.dot_dimension_numbers<[1], [0], [0], [1], [0, 0, 1, 1], [], []>} : vector<192x28xf32>, vector<28x120xf32>, vector<192x120xf32> -> vector<192x120xf32>
    %8 = arith.addf %1, %7 : vector<192x120xf32>
    %c1 = arith.constant 1 : index
    %c0_8 = arith.constant 0 : index
    %c0_9 = arith.constant 0 : index
    %c0_10 = arith.constant 0 : index
    %9 = vector.load %arg2[%c1, %c0_8, %c0_9, %c0_10] : memref<2x5x28x120xf32, #tpu.memory_space<vmem>>, vector<1x1x28x120xf32>
    %10 = vector.shape_cast %9 : vector<1x1x28x120xf32> to vector<28x120xf32>
    %cst_11 = arith.constant dense<0.000000e+00> : vector<192x120xf32>
    %11 = tpu.matmul %4, %10, %cst_11 {dimension_numbers = #tpu.dot_dimension_numbers<[1], [0], [0], [1], [0, 0, 1, 1], [], []>} : vector<192x28xf32>, vector<28x120xf32>, vector<192x120xf32> -> vector<192x120xf32>
    %12 = arith.addf %2, %11 : vector<192x120xf32>
    %13 = vector.extract_strided_slice %0 {offsets = [1, 0, 0], sizes = [24, 8, 28], strides = [1, 1, 1]} : vector<28x8x28xf32> to vector<24x8x28xf32>
    %14 = vector.shape_cast %13 : vector<24x8x28xf32> to vector<192x28xf32>
    %c0_12 = arith.constant 0 : index
    %c1_13 = arith.constant 1 : index
    %c0_14 = arith.constant 0 : index
    %c0_15 = arith.constant 0 : index
    %15 = vector.load %arg2[%c0_12, %c1_13, %c0_14, %c0_15] : memref<2x5x28x120xf32, #tpu.memory_space<vmem>>, vector<1x1x28x120xf32>
    %16 = vector.shape_cast %15 : vector<1x1x28x120xf32> to vector<28x120xf32>
    %cst_16 = arith.constant dense<0.000000e+00> : vector<192x120xf32>
    %17 = tpu.matmul %14, %16, %cst_16 {dimension_numbers = #tpu.dot_dimension_numbers<[1], [0], [0], [1], [0, 0, 1, 1], [], []>} : vector<192x28xf32>, vector<28x120xf32>, vector<192x120xf32> -> vector<192x120xf32>
    %18 = arith.addf %8, %17 : vector<192x120xf32>
    %c1_17 = arith.constant 1 : index
    %c1_18 = arith.constant 1 : index
    %c0_19 = arith.constant 0 : index
    %c0_20 = arith.constant 0 : index
    %19 = vector.load %arg2[%c1_17, %c1_18, %c0_19, %c0_20] : memref<2x5x28x120xf32, #tpu.memory_space<vmem>>, vector<1x1x28x120xf32>
    %20 = vector.shape_cast %19 : vector<1x1x28x120xf32> to vector<28x120xf32>
    %cst_21 = arith.constant dense<0.000000e+00> : vector<192x120xf32>
    %21 = tpu.matmul %14, %20, %cst_21 {dimension_numbers = #tpu.dot_dimension_numbers<[1], [0], [0], [1], [0, 0, 1, 1], [], []>} : vector<192x28xf32>, vector<28x120xf32>, vector<192x120xf32> -> vector<192x120xf32>
    %22 = arith.addf %12, %21 : vector<192x120xf32>
    %23 = vector.extract_strided_slice %0 {offsets = [2, 0, 0], sizes = [24, 8, 28], strides = [1, 1, 1]} : vector<28x8x28xf32> to vector<24x8x28xf32>
    %24 = vector.shape_cast %23 : vector<24x8x28xf32> to vector<192x28xf32>
    %c0_22 = arith.constant 0 : index
    %c2 = arith.constant 2 : index
    %c0_23 = arith.constant 0 : index
    %c0_24 = arith.constant 0 : index
    %25 = vector.load %arg2[%c0_22, %c2, %c0_23, %c0_24] : memref<2x5x28x120xf32, #tpu.memory_space<vmem>>, vector<1x1x28x120xf32>
    %26 = vector.shape_cast %25 : vector<1x1x28x120xf32> to vector<28x120xf32>
    %cst_25 = arith.constant dense<0.000000e+00> : vector<192x120xf32>
    %27 = tpu.matmul %24, %26, %cst_25 {dimension_numbers = #tpu.dot_dimension_numbers<[1], [0], [0], [1], [0, 0, 1, 1], [], []>} : vector<192x28xf32>, vector<28x120xf32>, vector<192x120xf32> -> vector<192x120xf32>
    %28 = arith.addf %18, %27 : vector<192x120xf32>
    %c1_26 = arith.constant 1 : index
    %c2_27 = arith.constant 2 : index
    %c0_28 = arith.constant 0 : index
    %c0_29 = arith.constant 0 : index
    %29 = vector.load %arg2[%c1_26, %c2_27, %c0_28, %c0_29] : memref<2x5x28x120xf32, #tpu.memory_space<vmem>>, vector<1x1x28x120xf32>
    %30 = vector.shape_cast %29 : vector<1x1x28x120xf32> to vector<28x120xf32>
    %cst_30 = arith.constant dense<0.000000e+00> : vector<192x120xf32>
    %31 = tpu.matmul %24, %30, %cst_30 {dimension_numbers = #tpu.dot_dimension_numbers<[1], [0], [0], [1], [0, 0, 1, 1], [], []>} : vector<192x28xf32>, vector<28x120xf32>, vector<192x120xf32> -> vector<192x120xf32>
    %32 = arith.addf %22, %31 : vector<192x120xf32>
    %33 = vector.extract_strided_slice %0 {offsets = [3, 0, 0], sizes = [24, 8, 28], strides = [1, 1, 1]} : vector<28x8x28xf32> to vector<24x8x28xf32>
    %34 = vector.shape_cast %33 : vector<24x8x28xf32> to vector<192x28xf32>
    %c0_31 = arith.constant 0 : index
    %c3 = arith.constant 3 : index
    %c0_32 = arith.constant 0 : index
    %c0_33 = arith.constant 0 : index
    %35 = vector.load %arg2[%c0_31, %c3, %c0_32, %c0_33] : memref<2x5x28x120xf32, #tpu.memory_space<vmem>>, vector<1x1x28x120xf32>
    %36 = vector.shape_cast %35 : vector<1x1x28x120xf32> to vector<28x120xf32>
    %cst_34 = arith.constant dense<0.000000e+00> : vector<192x120xf32>
    %37 = tpu.matmul %34, %36, %cst_34 {dimension_numbers = #tpu.dot_dimension_numbers<[1], [0], [0], [1], [0, 0, 1, 1], [], []>} : vector<192x28xf32>, vector<28x120xf32>, vector<192x120xf32> -> vector<192x120xf32>
    %38 = arith.addf %28, %37 : vector<192x120xf32>
    %c1_35 = arith.constant 1 : index
    %c3_36 = arith.constant 3 : index
    %c0_37 = arith.constant 0 : index
    %c0_38 = arith.constant 0 : index
    %39 = vector.load %arg2[%c1_35, %c3_36, %c0_37, %c0_38] : memref<2x5x28x120xf32, #tpu.memory_space<vmem>>, vector<1x1x28x120xf32>
    %40 = vector.shape_cast %39 : vector<1x1x28x120xf32> to vector<28x120xf32>
    %cst_39 = arith.constant dense<0.000000e+00> : vector<192x120xf32>
    %41 = tpu.matmul %34, %40, %cst_39 {dimension_numbers = #tpu.dot_dimension_numbers<[1], [0], [0], [1], [0, 0, 1, 1], [], []>} : vector<192x28xf32>, vector<28x120xf32>, vector<192x120xf32> -> vector<192x120xf32>
    %42 = arith.addf %32, %41 : vector<192x120xf32>
    %43 = vector.extract_strided_slice %0 {offsets = [4, 0, 0], sizes = [24, 8, 28], strides = [1, 1, 1]} : vector<28x8x28xf32> to vector<24x8x28xf32>
    %44 = vector.shape_cast %43 : vector<24x8x28xf32> to vector<192x28xf32>
    %c0_40 = arith.constant 0 : index
    %c4 = arith.constant 4 : index
    %c0_41 = arith.constant 0 : index
    %c0_42 = arith.constant 0 : index
    %45 = vector.load %arg2[%c0_40, %c4, %c0_41, %c0_42] : memref<2x5x28x120xf32, #tpu.memory_space<vmem>>, vector<1x1x28x120xf32>
    %46 = vector.shape_cast %45 : vector<1x1x28x120xf32> to vector<28x120xf32>
    %cst_43 = arith.constant dense<0.000000e+00> : vector<192x120xf32>
    %47 = tpu.matmul %44, %46, %cst_43 {dimension_numbers = #tpu.dot_dimension_numbers<[1], [0], [0], [1], [0, 0, 1, 1], [], []>} : vector<192x28xf32>, vector<28x120xf32>, vector<192x120xf32> -> vector<192x120xf32>
    %48 = arith.addf %38, %47 : vector<192x120xf32>
    %c1_44 = arith.constant 1 : index
    %c4_45 = arith.constant 4 : index
    %c0_46 = arith.constant 0 : index
    %c0_47 = arith.constant 0 : index
    %49 = vector.load %arg2[%c1_44, %c4_45, %c0_46, %c0_47] : memref<2x5x28x120xf32, #tpu.memory_space<vmem>>, vector<1x1x28x120xf32>
    %50 = vector.shape_cast %49 : vector<1x1x28x120xf32> to vector<28x120xf32>
    %cst_48 = arith.constant dense<0.000000e+00> : vector<192x120xf32>
    %51 = tpu.matmul %44, %50, %cst_48 {dimension_numbers = #tpu.dot_dimension_numbers<[1], [0], [0], [1], [0, 0, 1, 1], [], []>} : vector<192x28xf32>, vector<28x120xf32>, vector<192x120xf32> -> vector<192x120xf32>
    %52 = arith.addf %42, %51 : vector<192x120xf32>
    %53 = arith.maximumf %48, %52 : vector<192x120xf32>
    %c0_49 = arith.constant 0 : index
    %c0_50 = arith.constant 0 : index
    %54 = vector.load %arg3[%c0_49, %c0_50] : memref<1x120xf32, #tpu.memory_space<vmem>>, vector<1x120xf32>
    %55 = vector.broadcast %54 : vector<1x120xf32> to vector<192x120xf32>
    %56 = arith.addf %53, %55 : vector<192x120xf32>
    %cst_51 = arith.constant 0.000000e+00 : f32
    %57 = vector.broadcast %cst_51 : f32 to vector<192x120xf32>
    %58 = arith.maximumf %56, %57 : vector<192x120xf32>
    %59 = vector.shape_cast %58 : vector<192x120xf32> to vector<12x2x8x120xf32>
    %60 = vector.extract_strided_slice %59 {offsets = [0, 0, 0, 0], sizes = [12, 1, 8, 120], strides = [1, 1, 1, 1]} : vector<12x2x8x120xf32> to vector<12x1x8x120xf32>
    %61 = vector.shape_cast %60 : vector<12x1x8x120xf32> to vector<12x8x120xf32>
    %62 = vector.extract_strided_slice %59 {offsets = [0, 1, 0, 0], sizes = [12, 1, 8, 120], strides = [1, 1, 1, 1]} : vector<12x2x8x120xf32> to vector<12x1x8x120xf32>
    %63 = vector.shape_cast %62 : vector<12x1x8x120xf32> to vector<12x8x120xf32>
    %64 = arith.maximumf %61, %63 : vector<12x8x120xf32>
    %cst_52 = arith.constant 0.000000e+00 : f32
    %65 = vector.broadcast %cst_52 : f32 to vector<64x80xf32>
    %cst_53 = arith.constant 0.000000e+00 : f32
    %66 = vector.broadcast %cst_53 : f32 to vector<64x80xf32>
    %67 = vector.extract_strided_slice %64 {offsets = [0, 0, 0], sizes = [8, 8, 120], strides = [1, 1, 1]} : vector<12x8x120xf32> to vector<8x8x120xf32>
    %68 = vector.shape_cast %67 : vector<8x8x120xf32> to vector<64x120xf32>
    %c0_54 = arith.constant 0 : index
    %c0_55 = arith.constant 0 : index
    %c0_56 = arith.constant 0 : index
    %c0_57 = arith.constant 0 : index
    %69 = vector.load %arg4[%c0_54, %c0_55, %c0_56, %c0_57] : memref<2x5x120x80xf32, #tpu.memory_space<vmem>>, vector<1x1x120x80xf32>
    %70 = vector.shape_cast %69 : vector<1x1x120x80xf32> to vector<120x80xf32>
    %cst_58 = arith.constant dense<0.000000e+00> : vector<64x80xf32>
    %71 = tpu.matmul %68, %70, %cst_58 {dimension_numbers = #tpu.dot_dimension_numbers<[1], [0], [0], [1], [0, 0, 1, 1], [], []>} : vector<64x120xf32>, vector<120x80xf32>, vector<64x80xf32> -> vector<64x80xf32>
    %72 = arith.addf %65, %71 : vector<64x80xf32>
    %c1_59 = arith.constant 1 : index
    %c0_60 = arith.constant 0 : index
    %c0_61 = arith.constant 0 : index
    %c0_62 = arith.constant 0 : index
    %73 = vector.load %arg4[%c1_59, %c0_60, %c0_61, %c0_62] : memref<2x5x120x80xf32, #tpu.memory_space<vmem>>, vector<1x1x120x80xf32>
    %74 = vector.shape_cast %73 : vector<1x1x120x80xf32> to vector<120x80xf32>
    %cst_63 = arith.constant dense<0.000000e+00> : vector<64x80xf32>
    %75 = tpu.matmul %68, %74, %cst_63 {dimension_numbers = #tpu.dot_dimension_numbers<[1], [0], [0], [1], [0, 0, 1, 1], [], []>} : vector<64x120xf32>, vector<120x80xf32>, vector<64x80xf32> -> vector<64x80xf32>
    %76 = arith.addf %66, %75 : vector<64x80xf32>
    %77 = vector.extract_strided_slice %64 {offsets = [1, 0, 0], sizes = [8, 8, 120], strides = [1, 1, 1]} : vector<12x8x120xf32> to vector<8x8x120xf32>
    %78 = vector.shape_cast %77 : vector<8x8x120xf32> to vector<64x120xf32>
    %c0_64 = arith.constant 0 : index
    %c1_65 = arith.constant 1 : index
    %c0_66 = arith.constant 0 : index
    %c0_67 = arith.constant 0 : index
    %79 = vector.load %arg4[%c0_64, %c1_65, %c0_66, %c0_67] : memref<2x5x120x80xf32, #tpu.memory_space<vmem>>, vector<1x1x120x80xf32>
    %80 = vector.shape_cast %79 : vector<1x1x120x80xf32> to vector<120x80xf32>
    %cst_68 = arith.constant dense<0.000000e+00> : vector<64x80xf32>
    %81 = tpu.matmul %78, %80, %cst_68 {dimension_numbers = #tpu.dot_dimension_numbers<[1], [0], [0], [1], [0, 0, 1, 1], [], []>} : vector<64x120xf32>, vector<120x80xf32>, vector<64x80xf32> -> vector<64x80xf32>
    %82 = arith.addf %72, %81 : vector<64x80xf32>
    %c1_69 = arith.constant 1 : index
    %c1_70 = arith.constant 1 : index
    %c0_71 = arith.constant 0 : index
    %c0_72 = arith.constant 0 : index
    %83 = vector.load %arg4[%c1_69, %c1_70, %c0_71, %c0_72] : memref<2x5x120x80xf32, #tpu.memory_space<vmem>>, vector<1x1x120x80xf32>
    %84 = vector.shape_cast %83 : vector<1x1x120x80xf32> to vector<120x80xf32>
    %cst_73 = arith.constant dense<0.000000e+00> : vector<64x80xf32>
    %85 = tpu.matmul %78, %84, %cst_73 {dimension_numbers = #tpu.dot_dimension_numbers<[1], [0], [0], [1], [0, 0, 1, 1], [], []>} : vector<64x120xf32>, vector<120x80xf32>, vector<64x80xf32> -> vector<64x80xf32>
    %86 = arith.addf %76, %85 : vector<64x80xf32>
    %87 = vector.extract_strided_slice %64 {offsets = [2, 0, 0], sizes = [8, 8, 120], strides = [1, 1, 1]} : vector<12x8x120xf32> to vector<8x8x120xf32>
    %88 = vector.shape_cast %87 : vector<8x8x120xf32> to vector<64x120xf32>
    %c0_74 = arith.constant 0 : index
    %c2_75 = arith.constant 2 : index
    %c0_76 = arith.constant 0 : index
    %c0_77 = arith.constant 0 : index
    %89 = vector.load %arg4[%c0_74, %c2_75, %c0_76, %c0_77] : memref<2x5x120x80xf32, #tpu.memory_space<vmem>>, vector<1x1x120x80xf32>
    %90 = vector.shape_cast %89 : vector<1x1x120x80xf32> to vector<120x80xf32>
    %cst_78 = arith.constant dense<0.000000e+00> : vector<64x80xf32>
    %91 = tpu.matmul %88, %90, %cst_78 {dimension_numbers = #tpu.dot_dimension_numbers<[1], [0], [0], [1], [0, 0, 1, 1], [], []>} : vector<64x120xf32>, vector<120x80xf32>, vector<64x80xf32> -> vector<64x80xf32>
    %92 = arith.addf %82, %91 : vector<64x80xf32>
    %c1_79 = arith.constant 1 : index
    %c2_80 = arith.constant 2 : index
    %c0_81 = arith.constant 0 : index
    %c0_82 = arith.constant 0 : index
    %93 = vector.load %arg4[%c1_79, %c2_80, %c0_81, %c0_82] : memref<2x5x120x80xf32, #tpu.memory_space<vmem>>, vector<1x1x120x80xf32>
    %94 = vector.shape_cast %93 : vector<1x1x120x80xf32> to vector<120x80xf32>
    %cst_83 = arith.constant dense<0.000000e+00> : vector<64x80xf32>
    %95 = tpu.matmul %88, %94, %cst_83 {dimension_numbers = #tpu.dot_dimension_numbers<[1], [0], [0], [1], [0, 0, 1, 1], [], []>} : vector<64x120xf32>, vector<120x80xf32>, vector<64x80xf32> -> vector<64x80xf32>
    %96 = arith.addf %86, %95 : vector<64x80xf32>
    %97 = vector.extract_strided_slice %64 {offsets = [3, 0, 0], sizes = [8, 8, 120], strides = [1, 1, 1]} : vector<12x8x120xf32> to vector<8x8x120xf32>
    %98 = vector.shape_cast %97 : vector<8x8x120xf32> to vector<64x120xf32>
    %c0_84 = arith.constant 0 : index
    %c3_85 = arith.constant 3 : index
    %c0_86 = arith.constant 0 : index
    %c0_87 = arith.constant 0 : index
    %99 = vector.load %arg4[%c0_84, %c3_85, %c0_86, %c0_87] : memref<2x5x120x80xf32, #tpu.memory_space<vmem>>, vector<1x1x120x80xf32>
    %100 = vector.shape_cast %99 : vector<1x1x120x80xf32> to vector<120x80xf32>
    %cst_88 = arith.constant dense<0.000000e+00> : vector<64x80xf32>
    %101 = tpu.matmul %98, %100, %cst_88 {dimension_numbers = #tpu.dot_dimension_numbers<[1], [0], [0], [1], [0, 0, 1, 1], [], []>} : vector<64x120xf32>, vector<120x80xf32>, vector<64x80xf32> -> vector<64x80xf32>
    %102 = arith.addf %92, %101 : vector<64x80xf32>
    %c1_89 = arith.constant 1 : index
    %c3_90 = arith.constant 3 : index
    %c0_91 = arith.constant 0 : index
    %c0_92 = arith.constant 0 : index
    %103 = vector.load %arg4[%c1_89, %c3_90, %c0_91, %c0_92] : memref<2x5x120x80xf32, #tpu.memory_space<vmem>>, vector<1x1x120x80xf32>
    %104 = vector.shape_cast %103 : vector<1x1x120x80xf32> to vector<120x80xf32>
    %cst_93 = arith.constant dense<0.000000e+00> : vector<64x80xf32>
    %105 = tpu.matmul %98, %104, %cst_93 {dimension_numbers = #tpu.dot_dimension_numbers<[1], [0], [0], [1], [0, 0, 1, 1], [], []>} : vector<64x120xf32>, vector<120x80xf32>, vector<64x80xf32> -> vector<64x80xf32>
    %106 = arith.addf %96, %105 : vector<64x80xf32>
    %107 = vector.extract_strided_slice %64 {offsets = [4, 0, 0], sizes = [8, 8, 120], strides = [1, 1, 1]} : vector<12x8x120xf32> to vector<8x8x120xf32>
    %108 = vector.shape_cast %107 : vector<8x8x120xf32> to vector<64x120xf32>
    %c0_94 = arith.constant 0 : index
    %c4_95 = arith.constant 4 : index
    %c0_96 = arith.constant 0 : index
    %c0_97 = arith.constant 0 : index
    %109 = vector.load %arg4[%c0_94, %c4_95, %c0_96, %c0_97] : memref<2x5x120x80xf32, #tpu.memory_space<vmem>>, vector<1x1x120x80xf32>
    %110 = vector.shape_cast %109 : vector<1x1x120x80xf32> to vector<120x80xf32>
    %cst_98 = arith.constant dense<0.000000e+00> : vector<64x80xf32>
    %111 = tpu.matmul %108, %110, %cst_98 {dimension_numbers = #tpu.dot_dimension_numbers<[1], [0], [0], [1], [0, 0, 1, 1], [], []>} : vector<64x120xf32>, vector<120x80xf32>, vector<64x80xf32> -> vector<64x80xf32>
    %112 = arith.addf %102, %111 : vector<64x80xf32>
    %c1_99 = arith.constant 1 : index
    %c4_100 = arith.constant 4 : index
    %c0_101 = arith.constant 0 : index
    %c0_102 = arith.constant 0 : index
    %113 = vector.load %arg4[%c1_99, %c4_100, %c0_101, %c0_102] : memref<2x5x120x80xf32, #tpu.memory_space<vmem>>, vector<1x1x120x80xf32>
    %114 = vector.shape_cast %113 : vector<1x1x120x80xf32> to vector<120x80xf32>
    %cst_103 = arith.constant dense<0.000000e+00> : vector<64x80xf32>
    %115 = tpu.matmul %108, %114, %cst_103 {dimension_numbers = #tpu.dot_dimension_numbers<[1], [0], [0], [1], [0, 0, 1, 1], [], []>} : vector<64x120xf32>, vector<120x80xf32>, vector<64x80xf32> -> vector<64x80xf32>
    %116 = arith.addf %106, %115 : vector<64x80xf32>
    %117 = arith.maximumf %112, %116 : vector<64x80xf32>
    %c0_104 = arith.constant 0 : index
    %c0_105 = arith.constant 0 : index
    %118 = vector.load %arg5[%c0_104, %c0_105] : memref<1x80xf32, #tpu.memory_space<vmem>>, vector<1x80xf32>
    %119 = vector.broadcast %118 : vector<1x80xf32> to vector<64x80xf32>
    %120 = arith.addf %117, %119 : vector<64x80xf32>
    %cst_106 = arith.constant 0.000000e+00 : f32
    %121 = vector.broadcast %cst_106 : f32 to vector<64x80xf32>
    %122 = arith.maximumf %120, %121 : vector<64x80xf32>
    %123 = vector.shape_cast %122 : vector<64x80xf32> to vector<4x2x8x80xf32>
    %124 = vector.extract_strided_slice %123 {offsets = [0, 0, 0, 0], sizes = [4, 1, 8, 80], strides = [1, 1, 1, 1]} : vector<4x2x8x80xf32> to vector<4x1x8x80xf32>
    %125 = vector.shape_cast %124 : vector<4x1x8x80xf32> to vector<4x8x80xf32>
    %126 = vector.extract_strided_slice %123 {offsets = [0, 1, 0, 0], sizes = [4, 1, 8, 80], strides = [1, 1, 1, 1]} : vector<4x2x8x80xf32> to vector<4x1x8x80xf32>
    %127 = vector.shape_cast %126 : vector<4x1x8x80xf32> to vector<4x8x80xf32>
    %128 = arith.maximumf %125, %127 : vector<4x8x80xf32>
    %cst_107 = arith.constant 0.000000e+00 : f32
    %129 = vector.broadcast %cst_107 : f32 to vector<8x50xf32>
    %130 = vector.extract_strided_slice %128 {offsets = [0, 0, 0], sizes = [1, 8, 80], strides = [1, 1, 1]} : vector<4x8x80xf32> to vector<1x8x80xf32>
    %131 = vector.shape_cast %130 : vector<1x8x80xf32> to vector<8x80xf32>
    %c0_108 = arith.constant 0 : index
    %c0_109 = arith.constant 0 : index
    %c0_110 = arith.constant 0 : index
    %132 = vector.load %arg6[%c0_108, %c0_109, %c0_110] : memref<4x80x50xf32, #tpu.memory_space<vmem>>, vector<1x80x50xf32>
    %133 = vector.shape_cast %132 : vector<1x80x50xf32> to vector<80x50xf32>
    %cst_111 = arith.constant dense<0.000000e+00> : vector<8x50xf32>
    %134 = tpu.matmul %131, %133, %cst_111 {dimension_numbers = #tpu.dot_dimension_numbers<[1], [0], [0], [1], [0, 0, 1, 1], [], []>} : vector<8x80xf32>, vector<80x50xf32>, vector<8x50xf32> -> vector<8x50xf32>
    %135 = arith.addf %129, %134 : vector<8x50xf32>
    %136 = vector.extract_strided_slice %128 {offsets = [1, 0, 0], sizes = [1, 8, 80], strides = [1, 1, 1]} : vector<4x8x80xf32> to vector<1x8x80xf32>
    %137 = vector.shape_cast %136 : vector<1x8x80xf32> to vector<8x80xf32>
    %c1_112 = arith.constant 1 : index
    %c0_113 = arith.constant 0 : index
    %c0_114 = arith.constant 0 : index
    %138 = vector.load %arg6[%c1_112, %c0_113, %c0_114] : memref<4x80x50xf32, #tpu.memory_space<vmem>>, vector<1x80x50xf32>
    %139 = vector.shape_cast %138 : vector<1x80x50xf32> to vector<80x50xf32>
    %cst_115 = arith.constant dense<0.000000e+00> : vector<8x50xf32>
    %140 = tpu.matmul %137, %139, %cst_115 {dimension_numbers = #tpu.dot_dimension_numbers<[1], [0], [0], [1], [0, 0, 1, 1], [], []>} : vector<8x80xf32>, vector<80x50xf32>, vector<8x50xf32> -> vector<8x50xf32>
    %141 = arith.addf %135, %140 : vector<8x50xf32>
    %142 = vector.extract_strided_slice %128 {offsets = [2, 0, 0], sizes = [1, 8, 80], strides = [1, 1, 1]} : vector<4x8x80xf32> to vector<1x8x80xf32>
    %143 = vector.shape_cast %142 : vector<1x8x80xf32> to vector<8x80xf32>
    %c2_116 = arith.constant 2 : index
    %c0_117 = arith.constant 0 : index
    %c0_118 = arith.constant 0 : index
    %144 = vector.load %arg6[%c2_116, %c0_117, %c0_118] : memref<4x80x50xf32, #tpu.memory_space<vmem>>, vector<1x80x50xf32>
    %145 = vector.shape_cast %144 : vector<1x80x50xf32> to vector<80x50xf32>
    %cst_119 = arith.constant dense<0.000000e+00> : vector<8x50xf32>
    %146 = tpu.matmul %143, %145, %cst_119 {dimension_numbers = #tpu.dot_dimension_numbers<[1], [0], [0], [1], [0, 0, 1, 1], [], []>} : vector<8x80xf32>, vector<80x50xf32>, vector<8x50xf32> -> vector<8x50xf32>
    %147 = arith.addf %141, %146 : vector<8x50xf32>
    %148 = vector.extract_strided_slice %128 {offsets = [3, 0, 0], sizes = [1, 8, 80], strides = [1, 1, 1]} : vector<4x8x80xf32> to vector<1x8x80xf32>
    %149 = vector.shape_cast %148 : vector<1x8x80xf32> to vector<8x80xf32>
    %c3_120 = arith.constant 3 : index
    %c0_121 = arith.constant 0 : index
    %c0_122 = arith.constant 0 : index
    %150 = vector.load %arg6[%c3_120, %c0_121, %c0_122] : memref<4x80x50xf32, #tpu.memory_space<vmem>>, vector<1x80x50xf32>
    %151 = vector.shape_cast %150 : vector<1x80x50xf32> to vector<80x50xf32>
    %cst_123 = arith.constant dense<0.000000e+00> : vector<8x50xf32>
    %152 = tpu.matmul %149, %151, %cst_123 {dimension_numbers = #tpu.dot_dimension_numbers<[1], [0], [0], [1], [0, 0, 1, 1], [], []>} : vector<8x80xf32>, vector<80x50xf32>, vector<8x50xf32> -> vector<8x50xf32>
    %153 = arith.addf %147, %152 : vector<8x50xf32>
    %c0_124 = arith.constant 0 : index
    %c0_125 = arith.constant 0 : index
    %154 = vector.load %arg7[%c0_124, %c0_125] : memref<1x50xf32, #tpu.memory_space<vmem>>, vector<1x50xf32>
    %155 = vector.broadcast %154 : vector<1x50xf32> to vector<8x50xf32>
    %156 = arith.addf %153, %155 : vector<8x50xf32>
    %cst_126 = arith.constant 0.000000e+00 : f32
    %157 = vector.broadcast %cst_126 : f32 to vector<8x50xf32>
    %158 = arith.maximumf %156, %157 : vector<8x50xf32>
    %c0_127 = arith.constant 0 : index
    %c0_128 = arith.constant 0 : index
    %159 = vector.load %arg8[%c0_127, %c0_128] : memref<50x10xf32, #tpu.memory_space<vmem>>, vector<50x10xf32>
    %cst_129 = arith.constant dense<0.000000e+00> : vector<8x10xf32>
    %160 = tpu.matmul %158, %159, %cst_129 {dimension_numbers = #tpu.dot_dimension_numbers<[1], [0], [0], [1], [0, 0, 1, 1], [], []>} : vector<8x50xf32>, vector<50x10xf32>, vector<8x10xf32> -> vector<8x10xf32>
    %c0_130 = arith.constant 0 : index
    %c0_131 = arith.constant 0 : index
    %161 = vector.load %arg9[%c0_130, %c0_131] : memref<1x10xf32, #tpu.memory_space<vmem>>, vector<1x10xf32>
    %162 = vector.broadcast %161 : vector<1x10xf32> to vector<8x10xf32>
    %163 = arith.addf %160, %162 : vector<8x10xf32>
    %cst_132 = arith.constant dense<0xFF800000> : vector<8xf32>
    %164 = vector.multi_reduction <maximumf>, %163, %cst_132 [1] : vector<8x10xf32> to vector<8xf32>
    %165 = vector.shape_cast %164 : vector<8xf32> to vector<8x1xf32>
    %166 = vector.broadcast %165 : vector<8x1xf32> to vector<8x10xf32>
    %167 = arith.subf %163, %166 : vector<8x10xf32>
    %168 = math.exp %167 : vector<8x10xf32>
    %cst_133 = arith.constant dense<0.000000e+00> : vector<8xf32>
    %169 = vector.multi_reduction <add>, %168, %cst_133 [1] : vector<8x10xf32> to vector<8xf32>
    %170 = vector.shape_cast %169 : vector<8xf32> to vector<8x1xf32>
    %171 = math.log %170 : vector<8x1xf32>
    %172 = vector.broadcast %171 : vector<8x1xf32> to vector<8x10xf32>
    %173 = arith.subf %167, %172 : vector<8x10xf32>
    %c0_134 = arith.constant 0 : index
    %c0_135 = arith.constant 0 : index
    %174 = vector.load %arg10[%c0_134, %c0_135] : memref<8x10xf32, #tpu.memory_space<vmem>>, vector<8x10xf32>
    tpu.vector_store %arg10[%c0_134, %c0_135], %173 {strides = array<i32>} : memref<8x10xf32, #tpu.memory_space<vmem>>, vector<8x10xf32>,
    return
  }
  func.func @transform_0(%arg0: i32) -> (i32, i32, i32) {
    %c0_i32 = arith.constant 0 : i32
    %c0_i32_0 = arith.constant 0 : i32
    %c0_i32_1 = arith.constant 0 : i32
    return %c0_i32, %arg0, %c0_i32_0 : i32, i32, i32
  }
  func.func @transform_1(%arg0: i32) -> (i32, i32, i32, i32) {
    %c0_i32 = arith.constant 0 : i32
    %c0_i32_0 = arith.constant 0 : i32
    %c0_i32_1 = arith.constant 0 : i32
    %c0_i32_2 = arith.constant 0 : i32
    %c0_i32_3 = arith.constant 0 : i32
    return %c0_i32, %c0_i32_0, %c0_i32_1, %c0_i32_2 : i32, i32, i32, i32
  }
  func.func @transform_2(%arg0: i32) -> (i32, i32) {
    %c0_i32 = arith.constant 0 : i32
    %c0_i32_0 = arith.constant 0 : i32
    %c0_i32_1 = arith.constant 0 : i32
    return %c0_i32, %c0_i32_0 : i32, i32
  }
  func.func @transform_3(%arg0: i32) -> (i32, i32, i32, i32) {
    %c0_i32 = arith.constant 0 : i32
    %c0_i32_0 = arith.constant 0 : i32
    %c0_i32_1 = arith.constant 0 : i32
    %c0_i32_2 = arith.constant 0 : i32
    %c0_i32_3 = arith.constant 0 : i32
    return %c0_i32, %c0_i32_0, %c0_i32_1, %c0_i32_2 : i32, i32, i32, i32
  }
  func.func @transform_4(%arg0: i32) -> (i32, i32) {
    %c0_i32 = arith.constant 0 : i32
    %c0_i32_0 = arith.constant 0 : i32
    %c0_i32_1 = arith.constant 0 : i32
    return %c0_i32, %c0_i32_0 : i32, i32
  }
  func.func @transform_5(%arg0: i32) -> (i32, i32, i32) {
    %c0_i32 = arith.constant 0 : i32
    %c0_i32_0 = arith.constant 0 : i32
    %c0_i32_1 = arith.constant 0 : i32
    %c0_i32_2 = arith.constant 0 : i32
    return %c0_i32, %c0_i32_0, %c0_i32_1 : i32, i32, i32
  }
  func.func @transform_6(%arg0: i32) -> (i32, i32) {
    %c0_i32 = arith.constant 0 : i32
    %c0_i32_0 = arith.constant 0 : i32
    %c0_i32_1 = arith.constant 0 : i32
    return %c0_i32, %c0_i32_0 : i32, i32
  }
  func.func @transform_7(%arg0: i32) -> (i32, i32) {
    %c0_i32 = arith.constant 0 : i32
    %c0_i32_0 = arith.constant 0 : i32
    %c0_i32_1 = arith.constant 0 : i32
    return %c0_i32, %c0_i32_0 : i32, i32
  }
  func.func @transform_8(%arg0: i32) -> (i32, i32) {
    %c0_i32 = arith.constant 0 : i32
    %c0_i32_0 = arith.constant 0 : i32
    %c0_i32_1 = arith.constant 0 : i32
    return %c0_i32, %c0_i32_0 : i32, i32
  }
  func.func @transform_9(%arg0: i32) -> (i32, i32) {
    %c0_i32 = arith.constant 0 : i32
    %c0_i32_0 = arith.constant 0 : i32
    return %arg0, %c0_i32 : i32, i32
  }
}

</mosaic_0001>

<llo_original>
// kernel: tile.13
$region0: #{tile.13}
  #allocation0 [shape = 's32[1]{0}', space=sflag, size = 0x4, scoped, tag = 'scoped memory for tile.13']
  %s0 = inlined_call_operand.vmem [shape: f32[10], index: 0, kind: input, shape index: {}]
  %s1 = inlined_call_operand.vmem [shape: f32[12,10], index: 1, kind: output, shape index: {}]
  // Predicated region
  $region2: #{tile.13} parent=0 // pred_check
    _
  $region3: #{tile.13} parent=0 // pred_check_branch
    %3 = sbr.rel (0) target = $region5
  $region4: #{tile.13} parent=0 // pred_region
    _
  $region5: #{tile.13} parent=0 // pred_fallthru
    _
  %v4 = vld [vmem:[%s0] ss:$0 sm:$0xff]
  %5 = vst [vmem:[%s1] sm:$0xff] %v4
  %s6 = scalar_lea.vmem %s1, 8
  %7 = vst [vmem:[%s6] sm:$0xff] %v4

// kernel: tile.14
$region0: #{tile.14}
  %s0 = inlined_call_operand.vmem [shape: f32[12,10], index: 0, kind: input, shape index: {}]
  %s1 = inlined_call_operand.vmem [shape: f32[1,120], index: 1, kind: output, shape index: {}]
  $region1: #{tile.14} parent=0
    #allocation0 [shape = 'u8[4096]{0}', space=vmem, size = 0x1000, scoped, tag = 'scoped mem for output reshape']
    %v2 = vld [vmem:[%s0] sm:$0x1]
    %vm3 = vcmask 80896
    %4 = vst.msk [vmem:[#allocation0] sm:$0x1] %vm3, %v2
    %s5 = scalar_lea.vmem %s0, 11
    %v6 = vld [vmem:[%s5] sm:$0x1]
    %7 = vrot.lane.b32.xlu0 %v6, 110
    %v8 = vpop.permute.xlu0 %7
    %vm9 = vcmask 982896
    %10 = vst.msk [vmem:[#allocation0] sm:$0x1] %vm9, %v8
    %s11 = scalar_lea.vmem %s0, 10
    %v12 = vld [vmem:[%s11] sm:$0x1]
    %13 = vrot.lane.b32.xlu0 %v12, 100
    %v14 = vpop.permute.xlu0 %13
    %vm15 = vcmask 900896
    %16 = vst.msk [vmem:[#allocation0] sm:$0x1] %vm15, %v14
    %s17 = scalar_lea.vmem %s0, 9
    %v18 = vld [vmem:[%s17] sm:$0x1]
    %19 = vrot.lane.b32.xlu0 %v18, 90
    %v20 = vpop.permute.xlu0 %19
    %vm21 = vcmask 818896
    %22 = vst.msk [vmem:[#allocation0] sm:$0x1] %vm21, %v20
    %s23 = scalar_lea.vmem %s0, 8
    %v24 = vld [vmem:[%s23] sm:$0x1]
    %25 = vrot.lane.b32.xlu0 %v24, 80
    %v26 = vpop.permute.xlu0 %25
    %vm27 = vcmask 736896
    %28 = vst.msk [vmem:[#allocation0] sm:$0x1] %vm27, %v26
    %s29 = scalar_lea.vmem %s0, 7
    %v30 = vld [vmem:[%s29] sm:$0x1]
    %31 = vrot.lane.b32.xlu0 %v30, 70
    %v32 = vpop.permute.xlu0 %31
    %vm33 = vcmask 654896
    %34 = vst.msk [vmem:[#allocation0] sm:$0x1] %vm33, %v32
    %s35 = scalar_lea.vmem %s0, 6
    %v36 = vld [vmem:[%s35] sm:$0x1]
    %37 = vrot.lane.b32.xlu0 %v36, 60
    %v38 = vpop.permute.xlu0 %37
    %vm39 = vcmask 572896
    %40 = vst.msk [vmem:[#allocation0] sm:$0x1] %vm39, %v38
    %s41 = scalar_lea.vmem %s0, 5
    %v42 = vld [vmem:[%s41] sm:$0x1]
    %43 = vrot.lane.b32.xlu0 %v42, 50
    %v44 = vpop.permute.xlu0 %43
    %vm45 = vcmask 490896
    %46 = vst.msk [vmem:[#allocation0] sm:$0x1] %vm45, %v44
    %s47 = scalar_lea.vmem %s0, 4
    %v48 = vld [vmem:[%s47] sm:$0x1]
    %49 = vrot.lane.b32.xlu0 %v48, 40
    %v50 = vpop.permute.xlu0 %49
    %vm51 = vcmask 408896
    %52 = vst.msk [vmem:[#allocation0] sm:$0x1] %vm51, %v50
    %s53 = scalar_lea.vmem %s0, 3
    %v54 = vld [vmem:[%s53] sm:$0x1]
    %55 = vrot.lane.b32.xlu0 %v54, 30
    %v56 = vpop.permute.xlu0 %55
    %vm57 = vcmask 326896
    %58 = vst.msk [vmem:[#allocation0] sm:$0x1] %vm57, %v56
    %s59 = scalar_lea.vmem %s0, 2
    %v60 = vld [vmem:[%s59] sm:$0x1]
    %61 = vrot.lane.b32.xlu0 %v60, 20
    %v62 = vpop.permute.xlu0 %61
    %vm63 = vcmask 244896
    %64 = vst.msk [vmem:[#allocation0] sm:$0x1] %vm63, %v62
    %s65 = scalar_lea.vmem %s0, 1
    %v66 = vld [vmem:[%s65] sm:$0x1]
    %67 = vrot.lane.b32.xlu0 %v66, 10
    %v68 = vpop.permute.xlu0 %67
    %vm69 = vcmask 162896
    %70 = vst.msk [vmem:[#allocation0] sm:$0x1] %vm69, %v68
    %s72 = ssub.s32 2, 1
    %v73 = vld [vmem:[#allocation0] sm:%s72]
    %s75 = ssub.s32 2, 1
    %76 = vst [vmem:[%s1] sm:%s75] %v73

// kernel: tile.18
$region0: #{tile.18}
  #allocation0 [shape = 's32[1]{0}', space=sflag, size = 0x4, scoped, tag = 'scoped memory for tile.18']
  %s0 = inlined_call_operand.vmem [shape: f32[20], index: 0, kind: input, shape index: {}]
  %s1 = inlined_call_operand.vmem [shape: f32[4,20], index: 1, kind: output, shape index: {}]
  // Predicated region
  $region2: #{tile.18} parent=0 // pred_check
    _
  $region3: #{tile.18} parent=0 // pred_check_branch
    %3 = sbr.rel (0) target = $region5
  $region4: #{tile.18} parent=0 // pred_region
    _
  $region5: #{tile.18} parent=0 // pred_fallthru
    _
  %v4 = vld [vmem:[%s0] ss:$0 sm:$0xff]
  %5 = vst [vmem:[%s1] sm:$0xf] %v4

// kernel: tile.19
$region0: #{tile.19}
  %s0 = inlined_call_operand.vmem [shape: f32[4,20], index: 0, kind: input, shape index: {}]
  %s1 = inlined_call_operand.vmem [shape: f32[1,80], index: 1, kind: output, shape index: {}]
  $region1: #{tile.19} parent=0
    #allocation0 [shape = 'u8[4096]{0}', space=vmem, size = 0x1000, scoped, tag = 'scoped mem for output reshape']
    #allocation1 [shape = 'u8[4096]{0}', space=vmem, size = 0x1000, scoped, tag = 'scoped mem for input reshape']
    %s3 = ssub.s32 16, 1
    %v4 = vld [vmem:[%s0] sm:%s3]
    %5 = vst [vmem:[#allocation1] sm:%s3] %v4
    %v6 = vld [vmem:[#allocation1] sm:$0x1]
    %vm7 = vcmask 162816
    %8 = vst.msk [vmem:[#allocation0] sm:$0x1] %vm7, %v6
    %s9 = scalar_lea.vmem [#allocation1], 3
    %v10 = vld [vmem:[%s9] sm:$0x1]
    %11 = vrot.lane.b32.xlu0 %v10, 60
    %v12 = vpop.permute.xlu0 %11
    %vm13 = vcmask 654816
    %14 = vst.msk [vmem:[#allocation0] sm:$0x1] %vm13, %v12
    %s15 = scalar_lea.vmem [#allocation1], 2
    %v16 = vld [vmem:[%s15] sm:$0x1]
    %17 = vrot.lane.b32.xlu0 %v16, 40
    %v18 = vpop.permute.xlu0 %17
    %vm19 = vcmask 490816
    %20 = vst.msk [vmem:[#allocation0] sm:$0x1] %vm19, %v18
    %s21 = scalar_lea.vmem [#allocation1], 1
    %v22 = vld [vmem:[%s21] sm:$0x1]
    %23 = vrot.lane.b32.xlu0 %v22, 20
    %v24 = vpop.permute.xlu0 %23
    %vm25 = vcmask 326816
    %26 = vst.msk [vmem:[#allocation0] sm:$0x1] %vm25, %v24
    %s28 = ssub.s32 2, 1
    %v29 = vld [vmem:[#allocation0] sm:%s28]
    %s31 = ssub.s32 2, 1
    %32 = vst [vmem:[%s1] sm:%s31] %v29

// kernel: net_forward.1
$region0: #{net_forward.1}
  #allocation0 [shape = 'u32[]', space=smem, size = 0x4, offset = 0x4, fixed_abs, tag = 'smem constant byte address 0x4 - core index']
  #allocation1 [shape = 'u32[72,128]{1,0:T(1,128)}', space=vmem, size = 0x9000, scoped, tag = 'internal scratch']
  %s0 = inlined_call_operand.vmem [shape: f32[28,8,28], index: 0, kind: input, shape index: {}]
  %s1 = inlined_call_operand.vmem [shape: f32[2,5,28,120], index: 1, kind: input, shape index: {}]
  %s2 = inlined_call_operand.vmem [shape: f32[1,120], index: 2, kind: input, shape index: {}]
  %s3 = inlined_call_operand.vmem [shape: f32[2,5,120,80], index: 3, kind: input, shape index: {}]
  %s4 = inlined_call_operand.vmem [shape: f32[1,80], index: 4, kind: input, shape index: {}]
  %s5 = inlined_call_operand.vmem [shape: f32[4,80,50], index: 5, kind: input, shape index: {}]
  %s6 = inlined_call_operand.vmem [shape: f32[1,50], index: 6, kind: input, shape index: {}]
  %s7 = inlined_call_operand.vmem [shape: f32[50,10], index: 7, kind: input, shape index: {}]
  %s8 = inlined_call_operand.vmem [shape: f32[1,10], index: 8, kind: input, shape index: {}]
  %s9 = inlined_call_operand.vmem [shape: f32[8,10], index: 9, kind: output, shape index: {}]
  %s10 = sld [smem:[#allocation0]]
  $region46: #{net_forward.1} parent=0
    _
  %s12 = ssub.s32 1, %s10
  %s13 = scalar_select 0, %s12, %s10
  // Predicated region
  $region2: #{net_forward.1} parent=0 // pred_check
    _
  $region3: #{net_forward.1} parent=0 // pred_check_branch
    %15 = sbr.rel (0) target = $region5
  $region4: #{net_forward.1} parent=0 // pred_region
    _
  $region5: #{net_forward.1} parent=0 // pred_fallthru
    _
  // Predicated region
  $region6: #{net_forward.1} parent=0 // pred_check
    _
  $region7: #{net_forward.1} parent=0 // pred_check_branch
    %17 = sbr.rel (0) target = $region9
  $region8: #{net_forward.1} parent=0 // pred_region
    _
  $region9: #{net_forward.1} parent=0 // pred_fallthru
    _
  // Predicated region
  $region10: #{net_forward.1} parent=0 // pred_check
    _
  $region11: #{net_forward.1} parent=0 // pred_check_branch
    %19 = sbr.rel (0) target = $region13
  $region12: #{net_forward.1} parent=0 // pred_region
    _
  $region13: #{net_forward.1} parent=0 // pred_fallthru
    _
  // Predicated region
  $region14: #{net_forward.1} parent=0 // pred_check
    _
  $region15: #{net_forward.1} parent=0 // pred_check_branch
    %21 = sbr.rel (0) target = $region17
  $region16: #{net_forward.1} parent=0 // pred_region
    _
  $region17: #{net_forward.1} parent=0 // pred_fallthru
    _
  // Predicated region
  $region18: #{net_forward.1} parent=0 // pred_check
    _
  $region19: #{net_forward.1} parent=0 // pred_check_branch
    %23 = sbr.rel (0) target = $region21
  $region20: #{net_forward.1} parent=0 // pred_region
    _
  $region21: #{net_forward.1} parent=0 // pred_fallthru
    _
  // Predicated region
  $region22: #{net_forward.1} parent=0 // pred_check
    _
  $region23: #{net_forward.1} parent=0 // pred_check_branch
    %25 = sbr.rel (0) target = $region25
  $region24: #{net_forward.1} parent=0 // pred_region
    _
  $region25: #{net_forward.1} parent=0 // pred_fallthru
    _
  // Predicated region
  $region26: #{net_forward.1} parent=0 // pred_check
    _
  $region27: #{net_forward.1} parent=0 // pred_check_branch
    %27 = sbr.rel (0) target = $region29
  $region28: #{net_forward.1} parent=0 // pred_region
    _
  $region29: #{net_forward.1} parent=0 // pred_fallthru
    _
  // Predicated region
  $region30: #{net_forward.1} parent=0 // pred_check
    _
  $region31: #{net_forward.1} parent=0 // pred_check_branch
    %29 = sbr.rel (0) target = $region33
  $region32: #{net_forward.1} parent=0 // pred_region
    _
  $region33: #{net_forward.1} parent=0 // pred_fallthru
    _
  // Predicated region
  $region34: #{net_forward.1} parent=0 // pred_check
    _
  $region35: #{net_forward.1} parent=0 // pred_check_branch
    %31 = sbr.rel (0) target = $region37
  $region36: #{net_forward.1} parent=0 // pred_region
    _
  $region37: #{net_forward.1} parent=0 // pred_fallthru
    _
  %v32 = vld [vmem:[%s0] sm:$0xff]
  %v33 = vld [vmem:[%s0 + $0x8] sm:$0xff]
  %v34 = vld [vmem:[%s0 + $0x10] sm:$0xff]
  %v35 = vld [vmem:[%s0 + $0x18] sm:$0xff]
  %v36 = vld [vmem:[%s0 + $0x20] sm:$0xff]
  %v37 = vld [vmem:[%s0 + $0x28] sm:$0xff]
  %v38 = vld [vmem:[%s0 + $0x30] sm:$0xff]
  %v39 = vld [vmem:[%s0 + $0x38] sm:$0xff]
  %v40 = vld [vmem:[%s0 + $0x40] sm:$0xff]
  %v41 = vld [vmem:[%s0 + $0x48] sm:$0xff]
  %v42 = vld [vmem:[%s0 + $0x50] sm:$0xff]
  %v43 = vld [vmem:[%s0 + $0x58] sm:$0xff]
  %v44 = vld [vmem:[%s0 + $0x60] sm:$0xff]
  %v45 = vld [vmem:[%s0 + $0x68] sm:$0xff]
  %v46 = vld [vmem:[%s0 + $0x70] sm:$0xff]
  %v47 = vld [vmem:[%s0 + $0x78] sm:$0xff]
  %v48 = vld [vmem:[%s0 + $0x80] sm:$0xff]
  %v49 = vld [vmem:[%s0 + $0x88] sm:$0xff]
  %v50 = vld [vmem:[%s0 + $0x90] sm:$0xff]
  %v51 = vld [vmem:[%s0 + $0x98] sm:$0xff]
  %v52 = vld [vmem:[%s0 + $0xa0] sm:$0xff]
  %v53 = vld [vmem:[%s0 + $0xa8] sm:$0xff]
  %v54 = vld [vmem:[%s0 + $0xb0] sm:$0xff]
  %v55 = vld [vmem:[%s0 + $0xb8] sm:$0xff]
  %v56 = vld [vmem:[%s0 + $0xc0] sm:$0xff]
  %v57 = vld [vmem:[%s0 + $0xc8] sm:$0xff]
  %v58 = vld [vmem:[%s0 + $0xd0] sm:$0xff]
  %v59 = vld [vmem:[%s0 + $0xd8] sm:$0xff]
  %v60 = vld [vmem:[%s1] sm:$0xff]
  %v61 = vld [vmem:[%s1 + $0x8] sm:$0xff]
  %v62 = vld [vmem:[%s1 + $0x10] sm:$0xff]
  %v63 = vld [vmem:[%s1 + $0x18] sm:$0xf]
  %s64 = scalar_lea.vmem %s1, 160
  %v65 = vld [vmem:[%s64] sm:$0xff]
  %v66 = vld [vmem:[%s64 + $0x8] sm:$0xff]
  %v67 = vld [vmem:[%s64 + $0x10] sm:$0xff]
  %v68 = vld [vmem:[%s64 + $0x18] sm:$0xf]
  %s69 = scalar_lea.vmem %s1, 32
  %v70 = vld [vmem:[%s69] sm:$0xff]
  %v71 = vld [vmem:[%s69 + $0x8] sm:$0xff]
  %v72 = vld [vmem:[%s69 + $0x10] sm:$0xff]
  %v73 = vld [vmem:[%s69 + $0x18] sm:$0xf]
  %vm74 = vcmask 228352
  %v76 = vsel %vm74, %v33, 0
  %v79 = vsel %vm74, %v34, 0
  %v82 = vsel %vm74, %v35, 0
  %v85 = vsel %vm74, %v36, 0
  %v88 = vsel %vm74, %v37, 0
  %v91 = vsel %vm74, %v38, 0
  %v94 = vsel %vm74, %v39, 0
  %v97 = vsel %vm74, %v40, 0
  %v100 = vsel %vm74, %v41, 0
  %v103 = vsel %vm74, %v42, 0
  %v106 = vsel %vm74, %v43, 0
  %v109 = vsel %vm74, %v44, 0
  %v112 = vsel %vm74, %v45, 0
  %v115 = vsel %vm74, %v46, 0
  %v118 = vsel %vm74, %v47, 0
  %v121 = vsel %vm74, %v48, 0
  %v124 = vsel %vm74, %v49, 0
  %v127 = vsel %vm74, %v50, 0
  %v130 = vsel %vm74, %v51, 0
  %v133 = vsel %vm74, %v52, 0
  %v136 = vsel %vm74, %v53, 0
  %v139 = vsel %vm74, %v54, 0
  %v142 = vsel %vm74, %v55, 0
  %v145 = vsel %vm74, %v56, 0
  %vm147 = vcmask 1043456
  %v149 = vsel %vm147, %v73, 0
  %151 = vmatpush.msra.mxu0 0.0
  %152 = vmatpush.msra.mxu0 0.0
  %153 = vmatpush.msra.mxu0 0.0
  %154 = vmatpush.msra.mxu0 0.0
  %155 = vmatpush.msra.mxu0 0.0
  %156 = vmatpush.msra.mxu0 0.0
  %157 = vmatpush.msra.mxu0 0.0
  %158 = vmatpush.msra.mxu0 0.0
  %159 = vmatpush.msra.mxu0 0.0
  %160 = vmatpush.msra.mxu0 0.0
  %161 = vmatpush.msra.mxu0 0.0
  %162 = vmatpush.msra.mxu0 0.0
  %163 = vmatpush.msra.mxu0 %v149
  %164 = vmatpush.msra.mxu0 %v72
  %165 = vmatpush.msra.mxu0 %v71
  %166 = vmatpush.msra.mxu0 %v70
  %167 = vmatmul.f32.gmra.mxu0 %v76
  %v168 = vpop.f32.mrf.mxu0
  %v169 = vadd.f32 0.0, %v168
  %170 = vmatmul.f32.gmra.mxu0 %v79
  %v171 = vpop.f32.mrf.mxu0
  %v172 = vadd.f32 0.0, %v171
  %173 = vmatmul.f32.gmra.mxu0 %v82
  %v174 = vpop.f32.mrf.mxu0
  %v175 = vadd.f32 0.0, %v174
  %176 = vmatmul.f32.gmra.mxu0 %v85
  %v177 = vpop.f32.mrf.mxu0
  %v178 = vadd.f32 0.0, %v177
  %179 = vmatmul.f32.gmra.mxu0 %v88
  %v180 = vpop.f32.mrf.mxu0
  %v181 = vadd.f32 0.0, %v180
  %182 = vmatmul.f32.gmra.mxu0 %v91
  %v183 = vpop.f32.mrf.mxu0
  %v184 = vadd.f32 0.0, %v183
  %185 = vmatmul.f32.gmra.mxu0 %v94
  %v186 = vpop.f32.mrf.mxu0
  %v187 = vadd.f32 0.0, %v186
  %188 = vmatmul.f32.gmra.mxu0 %v97
  %v189 = vpop.f32.mrf.mxu0
  %v190 = vadd.f32 0.0, %v189
  %191 = vmatmul.f32.gmra.mxu0 %v100
  %v192 = vpop.f32.mrf.mxu0
  %v193 = vadd.f32 0.0, %v192
  %194 = vmatmul.f32.gmra.mxu0 %v103
  %v195 = vpop.f32.mrf.mxu0
  %v196 = vadd.f32 0.0, %v195
  %197 = vmatmul.f32.gmra.mxu0 %v106
  %v198 = vpop.f32.mrf.mxu0
  %v199 = vadd.f32 0.0, %v198
  %200 = vmatmul.f32.gmra.mxu0 %v109
  %v201 = vpop.f32.mrf.mxu0
  %v202 = vadd.f32 0.0, %v201
  %203 = vmatmul.f32.gmra.mxu0 %v112
  %v204 = vpop.f32.mrf.mxu0
  %v205 = vadd.f32 0.0, %v204
  %206 = vmatmul.f32.gmra.mxu0 %v115
  %v207 = vpop.f32.mrf.mxu0
  %v208 = vadd.f32 0.0, %v207
  %209 = vmatmul.f32.gmra.mxu0 %v118
  %v210 = vpop.f32.mrf.mxu0
  %v211 = vadd.f32 0.0, %v210
  %212 = vmatmul.f32.gmra.mxu0 %v121
  %v213 = vpop.f32.mrf.mxu0
  %v214 = vadd.f32 0.0, %v213
  %215 = vmatmul.f32.gmra.mxu0 %v124
  %v216 = vpop.f32.mrf.mxu0
  %v217 = vadd.f32 0.0, %v216
  %218 = vmatmul.f32.gmra.mxu0 %v127
  %v219 = vpop.f32.mrf.mxu0
  %v220 = vadd.f32 0.0, %v219
  %221 = vmatmul.f32.gmra.mxu0 %v130
  %v222 = vpop.f32.mrf.mxu0
  %v223 = vadd.f32 0.0, %v222
  %224 = vmatmul.f32.gmra.mxu0 %v133
  %v225 = vpop.f32.mrf.mxu0
  %v226 = vadd.f32 0.0, %v225
  %227 = vmatmul.f32.gmra.mxu0 %v136
  %v228 = vpop.f32.mrf.mxu0
  %v229 = vadd.f32 0.0, %v228
  %230 = vmatmul.f32.gmra.mxu0 %v139
  %v231 = vpop.f32.mrf.mxu0
  %v232 = vadd.f32 0.0, %v231
  %233 = vmatmul.f32.gmra.mxu0 %v142
  %v234 = vpop.f32.mrf.mxu0
  %v235 = vadd.f32 0.0, %v234
  %236 = vmatmul.f32.gmra.mxu0 %v145
  %v237 = vpop.f32.mrf.mxu0
  %v238 = vadd.f32 0.0, %v237
  %239 = vdwg.mxu0
  %v241 = vsel %vm74, %v32, 0
  %v244 = vsel %vm147, %v63, 0
  %246 = vmatpush.msra.mxu0 0.0
  %247 = vmatpush.msra.mxu0 0.0
  %248 = vmatpush.msra.mxu0 0.0
  %249 = vmatpush.msra.mxu0 0.0
  %250 = vmatpush.msra.mxu0 0.0
  %251 = vmatpush.msra.mxu0 0.0
  %252 = vmatpush.msra.mxu0 0.0
  %253 = vmatpush.msra.mxu0 0.0
  %254 = vmatpush.msra.mxu0 0.0
  %255 = vmatpush.msra.mxu0 0.0
  %256 = vmatpush.msra.mxu0 0.0
  %257 = vmatpush.msra.mxu0 0.0
  %258 = vmatpush.msra.mxu0 %v244
  %259 = vmatpush.msra.mxu0 %v62
  %260 = vmatpush.msra.mxu0 %v61
  %261 = vmatpush.msra.mxu0 %v60
  %262 = vmatmul.f32.gmra.mxu0 %v241
  %v263 = vpop.f32.mrf.mxu0
  %v264 = vadd.f32 %v169, %v263
  %265 = vmatmul.f32.gmra.mxu0 %v76
  %v266 = vpop.f32.mrf.mxu0
  %v267 = vadd.f32 %v172, %v266
  %268 = vmatmul.f32.gmra.mxu0 %v79
  %v269 = vpop.f32.mrf.mxu0
  %v270 = vadd.f32 %v175, %v269
  %271 = vmatmul.f32.gmra.mxu0 %v82
  %v272 = vpop.f32.mrf.mxu0
  %v273 = vadd.f32 %v178, %v272
  %274 = vmatmul.f32.gmra.mxu0 %v85
  %v275 = vpop.f32.mrf.mxu0
  %v276 = vadd.f32 %v181, %v275
  %277 = vmatmul.f32.gmra.mxu0 %v88
  %v278 = vpop.f32.mrf.mxu0
  %v279 = vadd.f32 %v184, %v278
  %280 = vmatmul.f32.gmra.mxu0 %v91
  %v281 = vpop.f32.mrf.mxu0
  %v282 = vadd.f32 %v187, %v281
  %283 = vmatmul.f32.gmra.mxu0 %v94
  %v284 = vpop.f32.mrf.mxu0
  %v285 = vadd.f32 %v190, %v284
  %286 = vmatmul.f32.gmra.mxu0 %v97
  %v287 = vpop.f32.mrf.mxu0
  %v288 = vadd.f32 %v193, %v287
  %289 = vmatmul.f32.gmra.mxu0 %v100
  %v290 = vpop.f32.mrf.mxu0
  %v291 = vadd.f32 %v196, %v290
  %292 = vmatmul.f32.gmra.mxu0 %v103
  %v293 = vpop.f32.mrf.mxu0
  %v294 = vadd.f32 %v199, %v293
  %295 = vmatmul.f32.gmra.mxu0 %v106
  %v296 = vpop.f32.mrf.mxu0
  %v297 = vadd.f32 %v202, %v296
  %298 = vmatmul.f32.gmra.mxu0 %v109
  %v299 = vpop.f32.mrf.mxu0
  %v300 = vadd.f32 %v205, %v299
  %301 = vmatmul.f32.gmra.mxu0 %v112
  %v302 = vpop.f32.mrf.mxu0
  %v303 = vadd.f32 %v208, %v302
  %304 = vmatmul.f32.gmra.mxu0 %v115
  %v305 = vpop.f32.mrf.mxu0
  %v306 = vadd.f32 %v211, %v305
  %307 = vmatmul.f32.gmra.mxu0 %v118
  %v308 = vpop.f32.mrf.mxu0
  %v309 = vadd.f32 %v214, %v308
  %310 = vmatmul.f32.gmra.mxu0 %v121
  %v311 = vpop.f32.mrf.mxu0
  %v312 = vadd.f32 %v217, %v311
  %313 = vmatmul.f32.gmra.mxu0 %v124
  %v314 = vpop.f32.mrf.mxu0
  %v315 = vadd.f32 %v220, %v314
  %316 = vmatmul.f32.gmra.mxu0 %v127
  %v317 = vpop.f32.mrf.mxu0
  %v318 = vadd.f32 %v223, %v317
  %319 = vmatmul.f32.gmra.mxu0 %v130
  %v320 = vpop.f32.mrf.mxu0
  %v321 = vadd.f32 %v226, %v320
  %322 = vmatmul.f32.gmra.mxu0 %v133
  %v323 = vpop.f32.mrf.mxu0
  %v324 = vadd.f32 %v229, %v323
  %325 = vmatmul.f32.gmra.mxu0 %v136
  %v326 = vpop.f32.mrf.mxu0
  %v327 = vadd.f32 %v232, %v326
  %328 = vmatmul.f32.gmra.mxu0 %v139
  %v329 = vpop.f32.mrf.mxu0
  %v330 = vadd.f32 %v235, %v329
  %331 = vmatmul.f32.gmra.mxu0 %v142
  %v332 = vpop.f32.mrf.mxu0
  %v333 = vadd.f32 %v238, %v332
  %334 = vdwg.mxu0
  %s335 = scalar_lea.vmem %s1, 192
  %v336 = vld [vmem:[%s335] sm:$0xff]
  %v337 = vld [vmem:[%s335 + $0x8] sm:$0xff]
  %v338 = vld [vmem:[%s335 + $0x10] sm:$0xff]
  %v339 = vld [vmem:[%s335 + $0x18] sm:$0xf]
  %v341 = vsel %vm147, %v339, 0
  %343 = vmatpush.msra.mxu0 0.0
  %344 = vmatpush.msra.mxu0 0.0
  %345 = vmatpush.msra.mxu0 0.0
  %346 = vmatpush.msra.mxu0 0.0
  %347 = vmatpush.msra.mxu0 0.0
  %348 = vmatpush.msra.mxu0 0.0
  %349 = vmatpush.msra.mxu0 0.0
  %350 = vmatpush.msra.mxu0 0.0
  %351 = vmatpush.msra.mxu0 0.0
  %352 = vmatpush.msra.mxu0 0.0
  %353 = vmatpush.msra.mxu0 0.0
  %354 = vmatpush.msra.mxu0 0.0
  %355 = vmatpush.msra.mxu0 %v341
  %356 = vmatpush.msra.mxu0 %v338
  %357 = vmatpush.msra.mxu0 %v337
  %358 = vmatpush.msra.mxu0 %v336
  %359 = vmatmul.f32.gmra.mxu0 %v76
  %v360 = vpop.f32.mrf.mxu0
  %v361 = vadd.f32 0.0, %v360
  %362 = vmatmul.f32.gmra.mxu0 %v79
  %v363 = vpop.f32.mrf.mxu0
  %v364 = vadd.f32 0.0, %v363
  %365 = vmatmul.f32.gmra.mxu0 %v82
  %v366 = vpop.f32.mrf.mxu0
  %v367 = vadd.f32 0.0, %v366
  %368 = vmatmul.f32.gmra.mxu0 %v85
  %v369 = vpop.f32.mrf.mxu0
  %v370 = vadd.f32 0.0, %v369
  %371 = vmatmul.f32.gmra.mxu0 %v88
  %v372 = vpop.f32.mrf.mxu0
  %v373 = vadd.f32 0.0, %v372
  %374 = vmatmul.f32.gmra.mxu0 %v91
  %v375 = vpop.f32.mrf.mxu0
  %v376 = vadd.f32 0.0, %v375
  %377 = vmatmul.f32.gmra.mxu0 %v94
  %v378 = vpop.f32.mrf.mxu0
  %v379 = vadd.f32 0.0, %v378
  %380 = vmatmul.f32.gmra.mxu0 %v97
  %v381 = vpop.f32.mrf.mxu0
  %v382 = vadd.f32 0.0, %v381
  %383 = vmatmul.f32.gmra.mxu0 %v100
  %v384 = vpop.f32.mrf.mxu0
  %v385 = vadd.f32 0.0, %v384
  %386 = vmatmul.f32.gmra.mxu0 %v103
  %v387 = vpop.f32.mrf.mxu0
  %v388 = vadd.f32 0.0, %v387
  %389 = vmatmul.f32.gmra.mxu0 %v106
  %v390 = vpop.f32.mrf.mxu0
  %v391 = vadd.f32 0.0, %v390
  %392 = vmatmul.f32.gmra.mxu0 %v109
  %v393 = vpop.f32.mrf.mxu0
  %v394 = vadd.f32 0.0, %v393
  %395 = vmatmul.f32.gmra.mxu0 %v112
  %v396 = vpop.f32.mrf.mxu0
  %v397 = vadd.f32 0.0, %v396
  %398 = vmatmul.f32.gmra.mxu0 %v115
  %v399 = vpop.f32.mrf.mxu0
  %v400 = vadd.f32 0.0, %v399
  %401 = vmatmul.f32.gmra.mxu0 %v118
  %v402 = vpop.f32.mrf.mxu0
  %v403 = vadd.f32 0.0, %v402
  %404 = vmatmul.f32.gmra.mxu0 %v121
  %v405 = vpop.f32.mrf.mxu0
  %v406 = vadd.f32 0.0, %v405
  %407 = vmatmul.f32.gmra.mxu0 %v124
  %v408 = vpop.f32.mrf.mxu0
  %v409 = vadd.f32 0.0, %v408
  %410 = vmatmul.f32.gmra.mxu0 %v127
  %v411 = vpop.f32.mrf.mxu0
  %v412 = vadd.f32 0.0, %v411
  %413 = vmatmul.f32.gmra.mxu0 %v130
  %v414 = vpop.f32.mrf.mxu0
  %v415 = vadd.f32 0.0, %v414
  %416 = vmatmul.f32.gmra.mxu0 %v133
  %v417 = vpop.f32.mrf.mxu0
  %v418 = vadd.f32 0.0, %v417
  %419 = vmatmul.f32.gmra.mxu0 %v136
  %v420 = vpop.f32.mrf.mxu0
  %v421 = vadd.f32 0.0, %v420
  %422 = vmatmul.f32.gmra.mxu0 %v139
  %v423 = vpop.f32.mrf.mxu0
  %v424 = vadd.f32 0.0, %v423
  %425 = vmatmul.f32.gmra.mxu0 %v142
  %v426 = vpop.f32.mrf.mxu0
  %v427 = vadd.f32 0.0, %v426
  %428 = vmatmul.f32.gmra.mxu0 %v145
  %v429 = vpop.f32.mrf.mxu0
  %v430 = vadd.f32 0.0, %v429
  %431 = vdwg.mxu0
  %v433 = vsel %vm147, %v68, 0
  %435 = vmatpush.msra.mxu0 0.0
  %436 = vmatpush.msra.mxu0 0.0
  %437 = vmatpush.msra.mxu0 0.0
  %438 = vmatpush.msra.mxu0 0.0
  %439 = vmatpush.msra.mxu0 0.0
  %440 = vmatpush.msra.mxu0 0.0
  %441 = vmatpush.msra.mxu0 0.0
  %442 = vmatpush.msra.mxu0 0.0
  %443 = vmatpush.msra.mxu0 0.0
  %444 = vmatpush.msra.mxu0 0.0
  %445 = vmatpush.msra.mxu0 0.0
  %446 = vmatpush.msra.mxu0 0.0
  %447 = vmatpush.msra.mxu0 %v433
  %448 = vmatpush.msra.mxu0 %v67
  %449 = vmatpush.msra.mxu0 %v66
  %450 = vmatpush.msra.mxu0 %v65
  %451 = vmatmul.f32.gmra.mxu0 %v241
  %v452 = vpop.f32.mrf.mxu0
  %v453 = vadd.f32 %v361, %v452
  %454 = vmatmul.f32.gmra.mxu0 %v76
  %v455 = vpop.f32.mrf.mxu0
  %v456 = vadd.f32 %v364, %v455
  %457 = vmatmul.f32.gmra.mxu0 %v79
  %v458 = vpop.f32.mrf.mxu0
  %v459 = vadd.f32 %v367, %v458
  %460 = vmatmul.f32.gmra.mxu0 %v82
  %v461 = vpop.f32.mrf.mxu0
  %v462 = vadd.f32 %v370, %v461
  %463 = vmatmul.f32.gmra.mxu0 %v85
  %v464 = vpop.f32.mrf.mxu0
  %v465 = vadd.f32 %v373, %v464
  %466 = vmatmul.f32.gmra.mxu0 %v88
  %v467 = vpop.f32.mrf.mxu0
  %v468 = vadd.f32 %v376, %v467
  %469 = vmatmul.f32.gmra.mxu0 %v91
  %v470 = vpop.f32.mrf.mxu0
  %v471 = vadd.f32 %v379, %v470
  %472 = vmatmul.f32.gmra.mxu0 %v94
  %v473 = vpop.f32.mrf.mxu0
  %v474 = vadd.f32 %v382, %v473
  %475 = vmatmul.f32.gmra.mxu0 %v97
  %v476 = vpop.f32.mrf.mxu0
  %v477 = vadd.f32 %v385, %v476
  %478 = vmatmul.f32.gmra.mxu0 %v100
  %v479 = vpop.f32.mrf.mxu0
  %v480 = vadd.f32 %v388, %v479
  %481 = vmatmul.f32.gmra.mxu0 %v103
  %v482 = vpop.f32.mrf.mxu0
  %v483 = vadd.f32 %v391, %v482
  %484 = vmatmul.f32.gmra.mxu0 %v106
  %v485 = vpop.f32.mrf.mxu0
  %v486 = vadd.f32 %v394, %v485
  %487 = vmatmul.f32.gmra.mxu0 %v109
  %v488 = vpop.f32.mrf.mxu0
  %v489 = vadd.f32 %v397, %v488
  %490 = vmatmul.f32.gmra.mxu0 %v112
  %v491 = vpop.f32.mrf.mxu0
  %v492 = vadd.f32 %v400, %v491
  %493 = vmatmul.f32.gmra.mxu0 %v115
  %v494 = vpop.f32.mrf.mxu0
  %v495 = vadd.f32 %v403, %v494
  %496 = vmatmul.f32.gmra.mxu0 %v118
  %v497 = vpop.f32.mrf.mxu0
  %v498 = vadd.f32 %v406, %v497
  %499 = vmatmul.f32.gmra.mxu0 %v121
  %v500 = vpop.f32.mrf.mxu0
  %v501 = vadd.f32 %v409, %v500
  %502 = vmatmul.f32.gmra.mxu0 %v124
  %v503 = vpop.f32.mrf.mxu0
  %v504 = vadd.f32 %v412, %v503
  %505 = vmatmul.f32.gmra.mxu0 %v127
  %v506 = vpop.f32.mrf.mxu0
  %v507 = vadd.f32 %v415, %v506
  %508 = vmatmul.f32.gmra.mxu0 %v130
  %v509 = vpop.f32.mrf.mxu0
  %v510 = vadd.f32 %v418, %v509
  %511 = vmatmul.f32.gmra.mxu0 %v133
  %v512 = vpop.f32.mrf.mxu0
  %v513 = vadd.f32 %v421, %v512
  %514 = vmatmul.f32.gmra.mxu0 %v136
  %v515 = vpop.f32.mrf.mxu0
  %v516 = vadd.f32 %v424, %v515
  %517 = vmatmul.f32.gmra.mxu0 %v139
  %v518 = vpop.f32.mrf.mxu0
  %v519 = vadd.f32 %v427, %v518
  %520 = vmatmul.f32.gmra.mxu0 %v142
  %v521 = vpop.f32.mrf.mxu0
  %v522 = vadd.f32 %v430, %v521
  %523 = vdwg.mxu0
  %s524 = scalar_lea.vmem %s1, 64
  %v525 = vld [vmem:[%s524] sm:$0xff]
  %v526 = vld [vmem:[%s524 + $0x8] sm:$0xff]
  %v527 = vld [vmem:[%s524 + $0x10] sm:$0xff]
  %v528 = vld [vmem:[%s524 + $0x18] sm:$0xf]
  %v530 = vsel %vm74, %v57, 0
  %v533 = vsel %vm147, %v528, 0
  %535 = vmatpush.msra.mxu0 0.0
  %536 = vmatpush.msra.mxu0 0.0
  %537 = vmatpush.msra.mxu0 0.0
  %538 = vmatpush.msra.mxu0 0.0
  %539 = vmatpush.msra.mxu0 0.0
  %540 = vmatpush.msra.mxu0 0.0
  %541 = vmatpush.msra.mxu0 0.0
  %542 = vmatpush.msra.mxu0 0.0
  %543 = vmatpush.msra.mxu0 0.0
  %544 = vmatpush.msra.mxu0 0.0
  %545 = vmatpush.msra.mxu0 0.0
  %546 = vmatpush.msra.mxu0 0.0
  %547 = vmatpush.msra.mxu0 %v533
  %548 = vmatpush.msra.mxu0 %v527
  %549 = vmatpush.msra.mxu0 %v526
  %550 = vmatpush.msra.mxu0 %v525
  %551 = vmatmul.f32.gmra.mxu0 %v79
  %v552 = vpop.f32.mrf.mxu0
  %v553 = vadd.f32 0.0, %v552
  %554 = vmatmul.f32.gmra.mxu0 %v82
  %v555 = vpop.f32.mrf.mxu0
  %v556 = vadd.f32 0.0, %v555
  %557 = vmatmul.f32.gmra.mxu0 %v85
  %v558 = vpop.f32.mrf.mxu0
  %v559 = vadd.f32 0.0, %v558
  %560 = vmatmul.f32.gmra.mxu0 %v88
  %v561 = vpop.f32.mrf.mxu0
  %v562 = vadd.f32 0.0, %v561
  %563 = vmatmul.f32.gmra.mxu0 %v91
  %v564 = vpop.f32.mrf.mxu0
  %v565 = vadd.f32 0.0, %v564
  %566 = vmatmul.f32.gmra.mxu0 %v94
  %v567 = vpop.f32.mrf.mxu0
  %v568 = vadd.f32 0.0, %v567
  %569 = vmatmul.f32.gmra.mxu0 %v97
  %v570 = vpop.f32.mrf.mxu0
  %v571 = vadd.f32 0.0, %v570
  %572 = vmatmul.f32.gmra.mxu0 %v100
  %v573 = vpop.f32.mrf.mxu0
  %v574 = vadd.f32 0.0, %v573
  %575 = vmatmul.f32.gmra.mxu0 %v103
  %v576 = vpop.f32.mrf.mxu0
  %v577 = vadd.f32 0.0, %v576
  %578 = vmatmul.f32.gmra.mxu0 %v106
  %v579 = vpop.f32.mrf.mxu0
  %v580 = vadd.f32 0.0, %v579
  %581 = vmatmul.f32.gmra.mxu0 %v109
  %v582 = vpop.f32.mrf.mxu0
  %v583 = vadd.f32 0.0, %v582
  %584 = vmatmul.f32.gmra.mxu0 %v112
  %v585 = vpop.f32.mrf.mxu0
  %v586 = vadd.f32 0.0, %v585
  %587 = vmatmul.f32.gmra.mxu0 %v115
  %v588 = vpop.f32.mrf.mxu0
  %v589 = vadd.f32 0.0, %v588
  %590 = vmatmul.f32.gmra.mxu0 %v118
  %v591 = vpop.f32.mrf.mxu0
  %v592 = vadd.f32 0.0, %v591
  %593 = vmatmul.f32.gmra.mxu0 %v121
  %v594 = vpop.f32.mrf.mxu0
  %v595 = vadd.f32 0.0, %v594
  %596 = vmatmul.f32.gmra.mxu0 %v124
  %v597 = vpop.f32.mrf.mxu0
  %v598 = vadd.f32 0.0, %v597
  %599 = vmatmul.f32.gmra.mxu0 %v127
  %v600 = vpop.f32.mrf.mxu0
  %v601 = vadd.f32 0.0, %v600
  %602 = vmatmul.f32.gmra.mxu0 %v130
  %v603 = vpop.f32.mrf.mxu0
  %v604 = vadd.f32 0.0, %v603
  %605 = vmatmul.f32.gmra.mxu0 %v133
  %v606 = vpop.f32.mrf.mxu0
  %v607 = vadd.f32 0.0, %v606
  %608 = vmatmul.f32.gmra.mxu0 %v136
  %v609 = vpop.f32.mrf.mxu0
  %v610 = vadd.f32 0.0, %v609
  %611 = vmatmul.f32.gmra.mxu0 %v139
  %v612 = vpop.f32.mrf.mxu0
  %v613 = vadd.f32 0.0, %v612
  %614 = vmatmul.f32.gmra.mxu0 %v142
  %v615 = vpop.f32.mrf.mxu0
  %v616 = vadd.f32 0.0, %v615
  %617 = vmatmul.f32.gmra.mxu0 %v145
  %v618 = vpop.f32.mrf.mxu0
  %v619 = vadd.f32 0.0, %v618
  %620 = vmatmul.f32.gmra.mxu0 %v530
  %v621 = vpop.f32.mrf.mxu0
  %v622 = vadd.f32 0.0, %v621
  %623 = vdwg.mxu0
  %v624 = vadd.f32 %v264, %v553
  %v625 = vadd.f32 %v267, %v556
  %v626 = vadd.f32 %v270, %v559
  %v627 = vadd.f32 %v273, %v562
  %v628 = vadd.f32 %v276, %v565
  %v629 = vadd.f32 %v279, %v568
  %v630 = vadd.f32 %v282, %v571
  %v631 = vadd.f32 %v285, %v574
  %v632 = vadd.f32 %v288, %v577
  %v633 = vadd.f32 %v291, %v580
  %v634 = vadd.f32 %v294, %v583
  %v635 = vadd.f32 %v297, %v586
  %v636 = vadd.f32 %v300, %v589
  %v637 = vadd.f32 %v303, %v592
  %v638 = vadd.f32 %v306, %v595
  %v639 = vadd.f32 %v309, %v598
  %v640 = vadd.f32 %v312, %v601
  %v641 = vadd.f32 %v315, %v604
  %v642 = vadd.f32 %v318, %v607
  %v643 = vadd.f32 %v321, %v610
  %v644 = vadd.f32 %v324, %v613
  %v645 = vadd.f32 %v327, %v616
  %v646 = vadd.f32 %v330, %v619
  %v647 = vadd.f32 %v333, %v622
  %s648 = scalar_lea.vmem %s1, 224
  %v649 = vld [vmem:[%s648] sm:$0xff]
  %v650 = vld [vmem:[%s648 + $0x8] sm:$0xff]
  %v651 = vld [vmem:[%s648 + $0x10] sm:$0xff]
  %v652 = vld [vmem:[%s648 + $0x18] sm:$0xf]
  %v654 = vsel %vm147, %v652, 0
  %656 = vmatpush.msra.mxu0 0.0
  %657 = vmatpush.msra.mxu0 0.0
  %658 = vmatpush.msra.mxu0 0.0
  %659 = vmatpush.msra.mxu0 0.0
  %660 = vmatpush.msra.mxu0 0.0
  %661 = vmatpush.msra.mxu0 0.0
  %662 = vmatpush.msra.mxu0 0.0
  %663 = vmatpush.msra.mxu0 0.0
  %664 = vmatpush.msra.mxu0 0.0
  %665 = vmatpush.msra.mxu0 0.0
  %666 = vmatpush.msra.mxu0 0.0
  %667 = vmatpush.msra.mxu0 0.0
  %668 = vmatpush.msra.mxu0 %v654
  %669 = vmatpush.msra.mxu0 %v651
  %670 = vmatpush.msra.mxu0 %v650
  %671 = vmatpush.msra.mxu0 %v649
  %672 = vmatmul.f32.gmra.mxu0 %v79
  %v673 = vpop.f32.mrf.mxu0
  %v674 = vadd.f32 0.0, %v673
  %675 = vmatmul.f32.gmra.mxu0 %v82
  %v676 = vpop.f32.mrf.mxu0
  %v677 = vadd.f32 0.0, %v676
  %678 = vmatmul.f32.gmra.mxu0 %v85
  %v679 = vpop.f32.mrf.mxu0
  %v680 = vadd.f32 0.0, %v679
  %681 = vmatmul.f32.gmra.mxu0 %v88
  %v682 = vpop.f32.mrf.mxu0
  %v683 = vadd.f32 0.0, %v682
  %684 = vmatmul.f32.gmra.mxu0 %v91
  %v685 = vpop.f32.mrf.mxu0
  %v686 = vadd.f32 0.0, %v685
  %687 = vmatmul.f32.gmra.mxu0 %v94
  %v688 = vpop.f32.mrf.mxu0
  %v689 = vadd.f32 0.0, %v688
  %690 = vmatmul.f32.gmra.mxu0 %v97
  %v691 = vpop.f32.mrf.mxu0
  %v692 = vadd.f32 0.0, %v691
  %693 = vmatmul.f32.gmra.mxu0 %v100
  %v694 = vpop.f32.mrf.mxu0
  %v695 = vadd.f32 0.0, %v694
  %696 = vmatmul.f32.gmra.mxu0 %v103
  %v697 = vpop.f32.mrf.mxu0
  %v698 = vadd.f32 0.0, %v697
  %699 = vmatmul.f32.gmra.mxu0 %v106
  %v700 = vpop.f32.mrf.mxu0
  %v701 = vadd.f32 0.0, %v700
  %702 = vmatmul.f32.gmra.mxu0 %v109
  %v703 = vpop.f32.mrf.mxu0
  %v704 = vadd.f32 0.0, %v703
  %705 = vmatmul.f32.gmra.mxu0 %v112
  %v706 = vpop.f32.mrf.mxu0
  %v707 = vadd.f32 0.0, %v706
  %708 = vmatmul.f32.gmra.mxu0 %v115
  %v709 = vpop.f32.mrf.mxu0
  %v710 = vadd.f32 0.0, %v709
  %711 = vmatmul.f32.gmra.mxu0 %v118
  %v712 = vpop.f32.mrf.mxu0
  %v713 = vadd.f32 0.0, %v712
  %714 = vmatmul.f32.gmra.mxu0 %v121
  %v715 = vpop.f32.mrf.mxu0
  %v716 = vadd.f32 0.0, %v715
  %717 = vmatmul.f32.gmra.mxu0 %v124
  %v718 = vpop.f32.mrf.mxu0
  %v719 = vadd.f32 0.0, %v718
  %720 = vmatmul.f32.gmra.mxu0 %v127
  %v721 = vpop.f32.mrf.mxu0
  %v722 = vadd.f32 0.0, %v721
  %723 = vmatmul.f32.gmra.mxu0 %v130
  %v724 = vpop.f32.mrf.mxu0
  %v725 = vadd.f32 0.0, %v724
  %726 = vmatmul.f32.gmra.mxu0 %v133
  %v727 = vpop.f32.mrf.mxu0
  %v728 = vadd.f32 0.0, %v727
  %729 = vmatmul.f32.gmra.mxu0 %v136
  %v730 = vpop.f32.mrf.mxu0
  %v731 = vadd.f32 0.0, %v730
  %732 = vmatmul.f32.gmra.mxu0 %v139
  %v733 = vpop.f32.mrf.mxu0
  %v734 = vadd.f32 0.0, %v733
  %735 = vmatmul.f32.gmra.mxu0 %v142
  %v736 = vpop.f32.mrf.mxu0
  %v737 = vadd.f32 0.0, %v736
  %738 = vmatmul.f32.gmra.mxu0 %v145
  %v739 = vpop.f32.mrf.mxu0
  %v740 = vadd.f32 0.0, %v739
  %741 = vmatmul.f32.gmra.mxu0 %v530
  %v742 = vpop.f32.mrf.mxu0
  %v743 = vadd.f32 0.0, %v742
  %744 = vdwg.mxu0
  %v745 = vadd.f32 %v453, %v674
  %v746 = vadd.f32 %v456, %v677
  %v747 = vadd.f32 %v459, %v680
  %v748 = vadd.f32 %v462, %v683
  %v749 = vadd.f32 %v465, %v686
  %v750 = vadd.f32 %v468, %v689
  %v751 = vadd.f32 %v471, %v692
  %v752 = vadd.f32 %v474, %v695
  %v753 = vadd.f32 %v477, %v698
  %v754 = vadd.f32 %v480, %v701
  %v755 = vadd.f32 %v483, %v704
  %v756 = vadd.f32 %v486, %v707
  %v757 = vadd.f32 %v489, %v710
  %v758 = vadd.f32 %v492, %v713
  %v759 = vadd.f32 %v495, %v716
  %v760 = vadd.f32 %v498, %v719
  %v761 = vadd.f32 %v501, %v722
  %v762 = vadd.f32 %v504, %v725
  %v763 = vadd.f32 %v507, %v728
  %v764 = vadd.f32 %v510, %v731
  %v765 = vadd.f32 %v513, %v734
  %v766 = vadd.f32 %v516, %v737
  %v767 = vadd.f32 %v519, %v740
  %v768 = vadd.f32 %v522, %v743
  %s769 = scalar_lea.vmem %s1, 96
  %v770 = vld [vmem:[%s769] sm:$0xff]
  %v771 = vld [vmem:[%s769 + $0x8] sm:$0xff]
  %v772 = vld [vmem:[%s769 + $0x10] sm:$0xff]
  %v773 = vld [vmem:[%s769 + $0x18] sm:$0xf]
  %v775 = vsel %vm74, %v58, 0
  %v778 = vsel %vm147, %v773, 0
  %780 = vmatpush.msra.mxu0 0.0
  %781 = vmatpush.msra.mxu0 0.0
  %782 = vmatpush.msra.mxu0 0.0
  %783 = vmatpush.msra.mxu0 0.0
  %784 = vmatpush.msra.mxu0 0.0
  %785 = vmatpush.msra.mxu0 0.0
  %786 = vmatpush.msra.mxu0 0.0
  %787 = vmatpush.msra.mxu0 0.0
  %788 = vmatpush.msra.mxu0 0.0
  %789 = vmatpush.msra.mxu0 0.0
  %790 = vmatpush.msra.mxu0 0.0
  %791 = vmatpush.msra.mxu0 0.0
  %792 = vmatpush.msra.mxu0 %v778
  %793 = vmatpush.msra.mxu0 %v772
  %794 = vmatpush.msra.mxu0 %v771
  %795 = vmatpush.msra.mxu0 %v770
  %796 = vmatmul.f32.gmra.mxu0 %v82
  %v797 = vpop.f32.mrf.mxu0
  %v798 = vadd.f32 0.0, %v797
  %799 = vmatmul.f32.gmra.mxu0 %v85
  %v800 = vpop.f32.mrf.mxu0
  %v801 = vadd.f32 0.0, %v800
  %802 = vmatmul.f32.gmra.mxu0 %v88
  %v803 = vpop.f32.mrf.mxu0
  %v804 = vadd.f32 0.0, %v803
  %805 = vmatmul.f32.gmra.mxu0 %v91
  %v806 = vpop.f32.mrf.mxu0
  %v807 = vadd.f32 0.0, %v806
  %808 = vmatmul.f32.gmra.mxu0 %v94
  %v809 = vpop.f32.mrf.mxu0
  %v810 = vadd.f32 0.0, %v809
  %811 = vmatmul.f32.gmra.mxu0 %v97
  %v812 = vpop.f32.mrf.mxu0
  %v813 = vadd.f32 0.0, %v812
  %814 = vmatmul.f32.gmra.mxu0 %v100
  %v815 = vpop.f32.mrf.mxu0
  %v816 = vadd.f32 0.0, %v815
  %817 = vmatmul.f32.gmra.mxu0 %v103
  %v818 = vpop.f32.mrf.mxu0
  %v819 = vadd.f32 0.0, %v818
  %820 = vmatmul.f32.gmra.mxu0 %v106
  %v821 = vpop.f32.mrf.mxu0
  %v822 = vadd.f32 0.0, %v821
  %823 = vmatmul.f32.gmra.mxu0 %v109
  %v824 = vpop.f32.mrf.mxu0
  %v825 = vadd.f32 0.0, %v824
  %826 = vmatmul.f32.gmra.mxu0 %v112
  %v827 = vpop.f32.mrf.mxu0
  %v828 = vadd.f32 0.0, %v827
  %829 = vmatmul.f32.gmra.mxu0 %v115
  %v830 = vpop.f32.mrf.mxu0
  %v831 = vadd.f32 0.0, %v830
  %832 = vmatmul.f32.gmra.mxu0 %v118
  %v833 = vpop.f32.mrf.mxu0
  %v834 = vadd.f32 0.0, %v833
  %835 = vmatmul.f32.gmra.mxu0 %v121
  %v836 = vpop.f32.mrf.mxu0
  %v837 = vadd.f32 0.0, %v836
  %838 = vmatmul.f32.gmra.mxu0 %v124
  %v839 = vpop.f32.mrf.mxu0
  %v840 = vadd.f32 0.0, %v839
  %841 = vmatmul.f32.gmra.mxu0 %v127
  %v842 = vpop.f32.mrf.mxu0
  %v843 = vadd.f32 0.0, %v842
  %844 = vmatmul.f32.gmra.mxu0 %v130
  %v845 = vpop.f32.mrf.mxu0
  %v846 = vadd.f32 0.0, %v845
  %847 = vmatmul.f32.gmra.mxu0 %v133
  %v848 = vpop.f32.mrf.mxu0
  %v849 = vadd.f32 0.0, %v848
  %850 = vmatmul.f32.gmra.mxu0 %v136
  %v851 = vpop.f32.mrf.mxu0
  %v852 = vadd.f32 0.0, %v851
  %853 = vmatmul.f32.gmra.mxu0 %v139
  %v854 = vpop.f32.mrf.mxu0
  %v855 = vadd.f32 0.0, %v854
  %856 = vmatmul.f32.gmra.mxu0 %v142
  %v857 = vpop.f32.mrf.mxu0
  %v858 = vadd.f32 0.0, %v857
  %859 = vmatmul.f32.gmra.mxu0 %v145
  %v860 = vpop.f32.mrf.mxu0
  %v861 = vadd.f32 0.0, %v860
  %862 = vmatmul.f32.gmra.mxu0 %v530
  %v863 = vpop.f32.mrf.mxu0
  %v864 = vadd.f32 0.0, %v863
  %865 = vmatmul.f32.gmra.mxu0 %v775
  %v866 = vpop.f32.mrf.mxu0
  %v867 = vadd.f32 0.0, %v866
  %868 = vdwg.mxu0
  %v869 = vadd.f32 %v624, %v798
  %v870 = vadd.f32 %v625, %v801
  %v871 = vadd.f32 %v626, %v804
  %v872 = vadd.f32 %v627, %v807
  %v873 = vadd.f32 %v628, %v810
  %v874 = vadd.f32 %v629, %v813
  %v875 = vadd.f32 %v630, %v816
  %v876 = vadd.f32 %v631, %v819
  %v877 = vadd.f32 %v632, %v822
  %v878 = vadd.f32 %v633, %v825
  %v879 = vadd.f32 %v634, %v828
  %v880 = vadd.f32 %v635, %v831
  %v881 = vadd.f32 %v636, %v834
  %v882 = vadd.f32 %v637, %v837
  %v883 = vadd.f32 %v638, %v840
  %v884 = vadd.f32 %v639, %v843
  %v885 = vadd.f32 %v640, %v846
  %v886 = vadd.f32 %v641, %v849
  %v887 = vadd.f32 %v642, %v852
  %v888 = vadd.f32 %v643, %v855
  %v889 = vadd.f32 %v644, %v858
  %v890 = vadd.f32 %v645, %v861
  %v891 = vadd.f32 %v646, %v864
  %v892 = vadd.f32 %v647, %v867
  %s893 = scalar_lea.vmem %s1, 256
  %v894 = vld [vmem:[%s893] sm:$0xff]
  %v895 = vld [vmem:[%s893 + $0x8] sm:$0xff]
  %v896 = vld [vmem:[%s893 + $0x10] sm:$0xff]
  %v897 = vld [vmem:[%s893 + $0x18] sm:$0xf]
  %v899 = vsel %vm147, %v897, 0
  %901 = vmatpush.msra.mxu0 0.0
  %902 = vmatpush.msra.mxu0 0.0
  %903 = vmatpush.msra.mxu0 0.0
  %904 = vmatpush.msra.mxu0 0.0
  %905 = vmatpush.msra.mxu0 0.0
  %906 = vmatpush.msra.mxu0 0.0
  %907 = vmatpush.msra.mxu0 0.0
  %908 = vmatpush.msra.mxu0 0.0
  %909 = vmatpush.msra.mxu0 0.0
  %910 = vmatpush.msra.mxu0 0.0
  %911 = vmatpush.msra.mxu0 0.0
  %912 = vmatpush.msra.mxu0 0.0
  %913 = vmatpush.msra.mxu0 %v899
  %914 = vmatpush.msra.mxu0 %v896
  %915 = vmatpush.msra.mxu0 %v895
  %916 = vmatpush.msra.mxu0 %v894
  %917 = vmatmul.f32.gmra.mxu0 %v82
  %v918 = vpop.f32.mrf.mxu0
  %v919 = vadd.f32 0.0, %v918
  %920 = vmatmul.f32.gmra.mxu0 %v85
  %v921 = vpop.f32.mrf.mxu0
  %v922 = vadd.f32 0.0, %v921
  %923 = vmatmul.f32.gmra.mxu0 %v88
  %v924 = vpop.f32.mrf.mxu0
  %v925 = vadd.f32 0.0, %v924
  %926 = vmatmul.f32.gmra.mxu0 %v91
  %v927 = vpop.f32.mrf.mxu0
  %v928 = vadd.f32 0.0, %v927
  %929 = vmatmul.f32.gmra.mxu0 %v94
  %v930 = vpop.f32.mrf.mxu0
  %v931 = vadd.f32 0.0, %v930
  %932 = vmatmul.f32.gmra.mxu0 %v97
  %v933 = vpop.f32.mrf.mxu0
  %v934 = vadd.f32 0.0, %v933
  %935 = vmatmul.f32.gmra.mxu0 %v100
  %v936 = vpop.f32.mrf.mxu0
  %v937 = vadd.f32 0.0, %v936
  %938 = vmatmul.f32.gmra.mxu0 %v103
  %v939 = vpop.f32.mrf.mxu0
  %v940 = vadd.f32 0.0, %v939
  %941 = vmatmul.f32.gmra.mxu0 %v106
  %v942 = vpop.f32.mrf.mxu0
  %v943 = vadd.f32 0.0, %v942
  %944 = vmatmul.f32.gmra.mxu0 %v109
  %v945 = vpop.f32.mrf.mxu0
  %v946 = vadd.f32 0.0, %v945
  %947 = vmatmul.f32.gmra.mxu0 %v112
  %v948 = vpop.f32.mrf.mxu0
  %v949 = vadd.f32 0.0, %v948
  %950 = vmatmul.f32.gmra.mxu0 %v115
  %v951 = vpop.f32.mrf.mxu0
  %v952 = vadd.f32 0.0, %v951
  %953 = vmatmul.f32.gmra.mxu0 %v118
  %v954 = vpop.f32.mrf.mxu0
  %v955 = vadd.f32 0.0, %v954
  %956 = vmatmul.f32.gmra.mxu0 %v121
  %v957 = vpop.f32.mrf.mxu0
  %v958 = vadd.f32 0.0, %v957
  %959 = vmatmul.f32.gmra.mxu0 %v124
  %v960 = vpop.f32.mrf.mxu0
  %v961 = vadd.f32 0.0, %v960
  %962 = vmatmul.f32.gmra.mxu0 %v127
  %v963 = vpop.f32.mrf.mxu0
  %v964 = vadd.f32 0.0, %v963
  %965 = vmatmul.f32.gmra.mxu0 %v130
  %v966 = vpop.f32.mrf.mxu0
  %v967 = vadd.f32 0.0, %v966
  %968 = vmatmul.f32.gmra.mxu0 %v133
  %v969 = vpop.f32.mrf.mxu0
  %v970 = vadd.f32 0.0, %v969
  %971 = vmatmul.f32.gmra.mxu0 %v136
  %v972 = vpop.f32.mrf.mxu0
  %v973 = vadd.f32 0.0, %v972
  %974 = vmatmul.f32.gmra.mxu0 %v139
  %v975 = vpop.f32.mrf.mxu0
  %v976 = vadd.f32 0.0, %v975
  %977 = vmatmul.f32.gmra.mxu0 %v142
  %v978 = vpop.f32.mrf.mxu0
  %v979 = vadd.f32 0.0, %v978
  %980 = vmatmul.f32.gmra.mxu0 %v145
  %v981 = vpop.f32.mrf.mxu0
  %v982 = vadd.f32 0.0, %v981
  %983 = vmatmul.f32.gmra.mxu0 %v530
  %v984 = vpop.f32.mrf.mxu0
  %v985 = vadd.f32 0.0, %v984
  %986 = vmatmul.f32.gmra.mxu0 %v775
  %v987 = vpop.f32.mrf.mxu0
  %v988 = vadd.f32 0.0, %v987
  %989 = vdwg.mxu0
  %v990 = vadd.f32 %v745, %v919
  %v991 = vadd.f32 %v746, %v922
  %v992 = vadd.f32 %v747, %v925
  %v993 = vadd.f32 %v748, %v928
  %v994 = vadd.f32 %v749, %v931
  %v995 = vadd.f32 %v750, %v934
  %v996 = vadd.f32 %v751, %v937
  %v997 = vadd.f32 %v752, %v940
  %v998 = vadd.f32 %v753, %v943
  %v999 = vadd.f32 %v754, %v946
  %v1000 = vadd.f32 %v755, %v949
  %v1001 = vadd.f32 %v756, %v952
  %v1002 = vadd.f32 %v757, %v955
  %v1003 = vadd.f32 %v758, %v958
  %v1004 = vadd.f32 %v759, %v961
  %v1005 = vadd.f32 %v760, %v964
  %v1006 = vadd.f32 %v761, %v967
  %v1007 = vadd.f32 %v762, %v970
  %v1008 = vadd.f32 %v763, %v973
  %v1009 = vadd.f32 %v764, %v976
  %v1010 = vadd.f32 %v765, %v979
  %v1011 = vadd.f32 %v766, %v982
  %v1012 = vadd.f32 %v767, %v985
  %v1013 = vadd.f32 %v768, %v988
  %s1014 = scalar_lea.vmem %s1, 128
  %v1015 = vld [vmem:[%s1014] sm:$0xff]
  %v1016 = vld [vmem:[%s1014 + $0x8] sm:$0xff]
  %v1017 = vld [vmem:[%s1014 + $0x10] sm:$0xff]
  %v1018 = vld [vmem:[%s1014 + $0x18] sm:$0xf]
  %v1020 = vsel %vm74, %v59, 0
  %v1023 = vsel %vm147, %v1018, 0
  %1025 = vmatpush.msra.mxu0 0.0
  %1026 = vmatpush.msra.mxu0 0.0
  %1027 = vmatpush.msra.mxu0 0.0
  %1028 = vmatpush.msra.mxu0 0.0
  %1029 = vmatpush.msra.mxu0 0.0
  %1030 = vmatpush.msra.mxu0 0.0
  %1031 = vmatpush.msra.mxu0 0.0
  %1032 = vmatpush.msra.mxu0 0.0
  %1033 = vmatpush.msra.mxu0 0.0
  %1034 = vmatpush.msra.mxu0 0.0
  %1035 = vmatpush.msra.mxu0 0.0
  %1036 = vmatpush.msra.mxu0 0.0
  %1037 = vmatpush.msra.mxu0 %v1023
  %1038 = vmatpush.msra.mxu0 %v1017
  %1039 = vmatpush.msra.mxu0 %v1016
  %1040 = vmatpush.msra.mxu0 %v1015
  %1041 = vmatmul.f32.gmra.mxu0 %v85
  %v1042 = vpop.f32.mrf.mxu0
  %v1043 = vadd.f32 0.0, %v1042
  %1044 = vmatmul.f32.gmra.mxu0 %v88
  %v1045 = vpop.f32.mrf.mxu0
  %v1046 = vadd.f32 0.0, %v1045
  %1047 = vmatmul.f32.gmra.mxu0 %v91
  %v1048 = vpop.f32.mrf.mxu0
  %v1049 = vadd.f32 0.0, %v1048
  %1050 = vmatmul.f32.gmra.mxu0 %v94
  %v1051 = vpop.f32.mrf.mxu0
  %v1052 = vadd.f32 0.0, %v1051
  %1053 = vmatmul.f32.gmra.mxu0 %v97
  %v1054 = vpop.f32.mrf.mxu0
  %v1055 = vadd.f32 0.0, %v1054
  %1056 = vmatmul.f32.gmra.mxu0 %v100
  %v1057 = vpop.f32.mrf.mxu0
  %v1058 = vadd.f32 0.0, %v1057
  %1059 = vmatmul.f32.gmra.mxu0 %v103
  %v1060 = vpop.f32.mrf.mxu0
  %v1061 = vadd.f32 0.0, %v1060
  %1062 = vmatmul.f32.gmra.mxu0 %v106
  %v1063 = vpop.f32.mrf.mxu0
  %v1064 = vadd.f32 0.0, %v1063
  %1065 = vmatmul.f32.gmra.mxu0 %v109
  %v1066 = vpop.f32.mrf.mxu0
  %v1067 = vadd.f32 0.0, %v1066
  %1068 = vmatmul.f32.gmra.mxu0 %v112
  %v1069 = vpop.f32.mrf.mxu0
  %v1070 = vadd.f32 0.0, %v1069
  %1071 = vmatmul.f32.gmra.mxu0 %v115
  %v1072 = vpop.f32.mrf.mxu0
  %v1073 = vadd.f32 0.0, %v1072
  %1074 = vmatmul.f32.gmra.mxu0 %v118
  %v1075 = vpop.f32.mrf.mxu0
  %v1076 = vadd.f32 0.0, %v1075
  %1077 = vmatmul.f32.gmra.mxu0 %v121
  %v1078 = vpop.f32.mrf.mxu0
  %v1079 = vadd.f32 0.0, %v1078
  %1080 = vmatmul.f32.gmra.mxu0 %v124
  %v1081 = vpop.f32.mrf.mxu0
  %v1082 = vadd.f32 0.0, %v1081
  %1083 = vmatmul.f32.gmra.mxu0 %v127
  %v1084 = vpop.f32.mrf.mxu0
  %v1085 = vadd.f32 0.0, %v1084
  %1086 = vmatmul.f32.gmra.mxu0 %v130
  %v1087 = vpop.f32.mrf.mxu0
  %v1088 = vadd.f32 0.0, %v1087
  %1089 = vmatmul.f32.gmra.mxu0 %v133
  %v1090 = vpop.f32.mrf.mxu0
  %v1091 = vadd.f32 0.0, %v1090
  %1092 = vmatmul.f32.gmra.mxu0 %v136
  %v1093 = vpop.f32.mrf.mxu0
  %v1094 = vadd.f32 0.0, %v1093
  %1095 = vmatmul.f32.gmra.mxu0 %v139
  %v1096 = vpop.f32.mrf.mxu0
  %v1097 = vadd.f32 0.0, %v1096
  %1098 = vmatmul.f32.gmra.mxu0 %v142
  %v1099 = vpop.f32.mrf.mxu0
  %v1100 = vadd.f32 0.0, %v1099
  %1101 = vmatmul.f32.gmra.mxu0 %v145
  %v1102 = vpop.f32.mrf.mxu0
  %v1103 = vadd.f32 0.0, %v1102
  %1104 = vmatmul.f32.gmra.mxu0 %v530
  %v1105 = vpop.f32.mrf.mxu0
  %v1106 = vadd.f32 0.0, %v1105
  %1107 = vmatmul.f32.gmra.mxu0 %v775
  %v1108 = vpop.f32.mrf.mxu0
  %v1109 = vadd.f32 0.0, %v1108
  %1110 = vmatmul.f32.gmra.mxu0 %v1020
  %v1111 = vpop.f32.mrf.mxu0
  %v1112 = vadd.f32 0.0, %v1111
  %1113 = vdwg.mxu0
  %v1114 = vadd.f32 %v869, %v1043
  %v1115 = vadd.f32 %v870, %v1046
  %v1116 = vadd.f32 %v871, %v1049
  %v1117 = vadd.f32 %v872, %v1052
  %v1118 = vadd.f32 %v873, %v1055
  %v1119 = vadd.f32 %v874, %v1058
  %v1120 = vadd.f32 %v875, %v1061
  %v1121 = vadd.f32 %v876, %v1064
  %v1122 = vadd.f32 %v877, %v1067
  %v1123 = vadd.f32 %v878, %v1070
  %v1124 = vadd.f32 %v879, %v1073
  %v1125 = vadd.f32 %v880, %v1076
  %v1126 = vadd.f32 %v881, %v1079
  %v1127 = vadd.f32 %v882, %v1082
  %v1128 = vadd.f32 %v883, %v1085
  %v1129 = vadd.f32 %v884, %v1088
  %v1130 = vadd.f32 %v885, %v1091
  %v1131 = vadd.f32 %v886, %v1094
  %v1132 = vadd.f32 %v887, %v1097
  %v1133 = vadd.f32 %v888, %v1100
  %v1134 = vadd.f32 %v889, %v1103
  %v1135 = vadd.f32 %v890, %v1106
  %v1136 = vadd.f32 %v891, %v1109
  %v1137 = vadd.f32 %v892, %v1112
  %s1138 = scalar_lea.vmem %s1, 288
  %v1139 = vld [vmem:[%s1138] sm:$0xff]
  %v1140 = vld [vmem:[%s1138 + $0x8] sm:$0xff]
  %v1141 = vld [vmem:[%s1138 + $0x10] sm:$0xff]
  %v1142 = vld [vmem:[%s1138 + $0x18] sm:$0xf]
  %v1144 = vsel %vm147, %v1142, 0
  %1146 = vmatpush.msra.mxu0 0.0
  %1147 = vmatpush.msra.mxu0 0.0
  %1148 = vmatpush.msra.mxu0 0.0
  %1149 = vmatpush.msra.mxu0 0.0
  %1150 = vmatpush.msra.mxu0 0.0
  %1151 = vmatpush.msra.mxu0 0.0
  %1152 = vmatpush.msra.mxu0 0.0
  %1153 = vmatpush.msra.mxu0 0.0
  %1154 = vmatpush.msra.mxu0 0.0
  %1155 = vmatpush.msra.mxu0 0.0
  %1156 = vmatpush.msra.mxu0 0.0
  %1157 = vmatpush.msra.mxu0 0.0
  %1158 = vmatpush.msra.mxu0 %v1144
  %1159 = vmatpush.msra.mxu0 %v1141
  %1160 = vmatpush.msra.mxu0 %v1140
  %1161 = vmatpush.msra.mxu0 %v1139
  %1162 = vmatmul.f32.gmra.mxu0 %v85
  %v1163 = vpop.f32.mrf.mxu0
  %v1164 = vadd.f32 0.0, %v1163
  %1165 = vmatmul.f32.gmra.mxu0 %v88
  %v1166 = vpop.f32.mrf.mxu0
  %v1167 = vadd.f32 0.0, %v1166
  %1168 = vmatmul.f32.gmra.mxu0 %v91
  %v1169 = vpop.f32.mrf.mxu0
  %v1170 = vadd.f32 0.0, %v1169
  %1171 = vmatmul.f32.gmra.mxu0 %v94
  %v1172 = vpop.f32.mrf.mxu0
  %v1173 = vadd.f32 0.0, %v1172
  %1174 = vmatmul.f32.gmra.mxu0 %v97
  %v1175 = vpop.f32.mrf.mxu0
  %v1176 = vadd.f32 0.0, %v1175
  %1177 = vmatmul.f32.gmra.mxu0 %v100
  %v1178 = vpop.f32.mrf.mxu0
  %v1179 = vadd.f32 0.0, %v1178
  %1180 = vmatmul.f32.gmra.mxu0 %v103
  %v1181 = vpop.f32.mrf.mxu0
  %v1182 = vadd.f32 0.0, %v1181
  %1183 = vmatmul.f32.gmra.mxu0 %v106
  %v1184 = vpop.f32.mrf.mxu0
  %v1185 = vadd.f32 0.0, %v1184
  %1186 = vmatmul.f32.gmra.mxu0 %v109
  %v1187 = vpop.f32.mrf.mxu0
  %v1188 = vadd.f32 0.0, %v1187
  %1189 = vmatmul.f32.gmra.mxu0 %v112
  %v1190 = vpop.f32.mrf.mxu0
  %v1191 = vadd.f32 0.0, %v1190
  %1192 = vmatmul.f32.gmra.mxu0 %v115
  %v1193 = vpop.f32.mrf.mxu0
  %v1194 = vadd.f32 0.0, %v1193
  %1195 = vmatmul.f32.gmra.mxu0 %v118
  %v1196 = vpop.f32.mrf.mxu0
  %v1197 = vadd.f32 0.0, %v1196
  %1198 = vmatmul.f32.gmra.mxu0 %v121
  %v1199 = vpop.f32.mrf.mxu0
  %v1200 = vadd.f32 0.0, %v1199
  %1201 = vmatmul.f32.gmra.mxu0 %v124
  %v1202 = vpop.f32.mrf.mxu0
  %v1203 = vadd.f32 0.0, %v1202
  %1204 = vmatmul.f32.gmra.mxu0 %v127
  %v1205 = vpop.f32.mrf.mxu0
  %v1206 = vadd.f32 0.0, %v1205
  %1207 = vmatmul.f32.gmra.mxu0 %v130
  %v1208 = vpop.f32.mrf.mxu0
  %v1209 = vadd.f32 0.0, %v1208
  %1210 = vmatmul.f32.gmra.mxu0 %v133
  %v1211 = vpop.f32.mrf.mxu0
  %v1212 = vadd.f32 0.0, %v1211
  %1213 = vmatmul.f32.gmra.mxu0 %v136
  %v1214 = vpop.f32.mrf.mxu0
  %v1215 = vadd.f32 0.0, %v1214
  %1216 = vmatmul.f32.gmra.mxu0 %v139
  %v1217 = vpop.f32.mrf.mxu0
  %v1218 = vadd.f32 0.0, %v1217
  %1219 = vmatmul.f32.gmra.mxu0 %v142
  %v1220 = vpop.f32.mrf.mxu0
  %v1221 = vadd.f32 0.0, %v1220
  %1222 = vmatmul.f32.gmra.mxu0 %v145
  %v1223 = vpop.f32.mrf.mxu0
  %v1224 = vadd.f32 0.0, %v1223
  %1225 = vmatmul.f32.gmra.mxu0 %v530
  %v1226 = vpop.f32.mrf.mxu0
  %v1227 = vadd.f32 0.0, %v1226
  %1228 = vmatmul.f32.gmra.mxu0 %v775
  %v1229 = vpop.f32.mrf.mxu0
  %v1230 = vadd.f32 0.0, %v1229
  %1231 = vmatmul.f32.gmra.mxu0 %v1020
  %v1232 = vpop.f32.mrf.mxu0
  %v1233 = vadd.f32 0.0, %v1232
  %1234 = vdwg.mxu0
  %v1235 = vadd.f32 %v990, %v1164
  %v1236 = vadd.f32 %v991, %v1167
  %v1237 = vadd.f32 %v992, %v1170
  %v1238 = vadd.f32 %v993, %v1173
  %v1239 = vadd.f32 %v994, %v1176
  %v1240 = vadd.f32 %v995, %v1179
  %v1241 = vadd.f32 %v996, %v1182
  %v1242 = vadd.f32 %v997, %v1185
  %v1243 = vadd.f32 %v998, %v1188
  %v1244 = vadd.f32 %v999, %v1191
  %v1245 = vadd.f32 %v1000, %v1194
  %v1246 = vadd.f32 %v1001, %v1197
  %v1247 = vadd.f32 %v1002, %v1200
  %v1248 = vadd.f32 %v1003, %v1203
  %v1249 = vadd.f32 %v1004, %v1206
  %v1250 = vadd.f32 %v1005, %v1209
  %v1251 = vadd.f32 %v1006, %v1212
  %v1252 = vadd.f32 %v1007, %v1215
  %v1253 = vadd.f32 %v1008, %v1218
  %v1254 = vadd.f32 %v1009, %v1221
  %v1255 = vadd.f32 %v1010, %v1224
  %v1256 = vadd.f32 %v1011, %v1227
  %v1257 = vadd.f32 %v1012, %v1230
  %v1258 = vadd.f32 %v1013, %v1233
  %v1259 = vmax.f32 %v1114, %v1235
  %v1260 = vmax.f32 %v1115, %v1236
  %v1261 = vmax.f32 %v1116, %v1237
  %v1262 = vmax.f32 %v1117, %v1238
  %v1263 = vmax.f32 %v1118, %v1239
  %v1264 = vmax.f32 %v1119, %v1240
  %v1265 = vmax.f32 %v1120, %v1241
  %v1266 = vmax.f32 %v1121, %v1242
  %v1267 = vmax.f32 %v1122, %v1243
  %v1268 = vmax.f32 %v1123, %v1244
  %v1269 = vmax.f32 %v1124, %v1245
  %v1270 = vmax.f32 %v1125, %v1246
  %v1271 = vmax.f32 %v1126, %v1247
  %v1272 = vmax.f32 %v1127, %v1248
  %v1273 = vmax.f32 %v1128, %v1249
  %v1274 = vmax.f32 %v1129, %v1250
  %v1275 = vmax.f32 %v1130, %v1251
  %v1276 = vmax.f32 %v1131, %v1252
  %v1277 = vmax.f32 %v1132, %v1253
  %v1278 = vmax.f32 %v1133, %v1254
  %v1279 = vmax.f32 %v1134, %v1255
  %v1280 = vmax.f32 %v1135, %v1256
  %v1281 = vmax.f32 %v1136, %v1257
  %v1282 = vmax.f32 %v1137, %v1258
  %v1283 = vld [vmem:[%s2] sm:$0x1]
  %v1285 = vperm.slane %v1283, 0
  %v1287 = vadd.f32 %v1259, %v1285
  %v1288 = vadd.f32 %v1260, %v1285
  %v1289 = vadd.f32 %v1261, %v1285
  %v1290 = vadd.f32 %v1262, %v1285
  %v1291 = vadd.f32 %v1263, %v1285
  %v1292 = vadd.f32 %v1264, %v1285
  %v1293 = vadd.f32 %v1265, %v1285
  %v1294 = vadd.f32 %v1266, %v1285
  %v1295 = vadd.f32 %v1267, %v1285
  %v1296 = vadd.f32 %v1268, %v1285
  %v1297 = vadd.f32 %v1269, %v1285
  %v1298 = vadd.f32 %v1270, %v1285
  %v1299 = vadd.f32 %v1271, %v1285
  %v1300 = vadd.f32 %v1272, %v1285
  %v1301 = vadd.f32 %v1273, %v1285
  %v1302 = vadd.f32 %v1274, %v1285
  %v1303 = vadd.f32 %v1275, %v1285
  %v1304 = vadd.f32 %v1276, %v1285
  %v1305 = vadd.f32 %v1277, %v1285
  %v1306 = vadd.f32 %v1278, %v1285
  %v1307 = vadd.f32 %v1279, %v1285
  %v1308 = vadd.f32 %v1280, %v1285
  %v1309 = vadd.f32 %v1281, %v1285
  %v1310 = vadd.f32 %v1282, %v1285
  %v1311 = vmax.f32 %v1287, 0.0
  %v1312 = vmax.f32 %v1288, 0.0
  %v1313 = vmax.f32 %v1289, 0.0
  %v1314 = vmax.f32 %v1290, 0.0
  %v1315 = vmax.f32 %v1291, 0.0
  %v1316 = vmax.f32 %v1292, 0.0
  %v1317 = vmax.f32 %v1293, 0.0
  %v1318 = vmax.f32 %v1294, 0.0
  %v1319 = vmax.f32 %v1295, 0.0
  %v1320 = vmax.f32 %v1296, 0.0
  %v1321 = vmax.f32 %v1297, 0.0
  %v1322 = vmax.f32 %v1298, 0.0
  %v1323 = vmax.f32 %v1299, 0.0
  %v1324 = vmax.f32 %v1300, 0.0
  %v1325 = vmax.f32 %v1301, 0.0
  %v1326 = vmax.f32 %v1302, 0.0
  %v1327 = vmax.f32 %v1303, 0.0
  %v1328 = vmax.f32 %v1304, 0.0
  %v1329 = vmax.f32 %v1305, 0.0
  %v1330 = vmax.f32 %v1306, 0.0
  %v1331 = vmax.f32 %v1307, 0.0
  %v1332 = vmax.f32 %v1308, 0.0
  %v1333 = vmax.f32 %v1309, 0.0
  %v1334 = vmax.f32 %v1310, 0.0
  %v1335 = vmax.f32 %v1311, %v1312
  %v1336 = vmax.f32 %v1313, %v1314
  %v1337 = vmax.f32 %v1315, %v1316
  %v1338 = vmax.f32 %v1317, %v1318
  %v1339 = vmax.f32 %v1319, %v1320
  %v1340 = vmax.f32 %v1321, %v1322
  %v1341 = vmax.f32 %v1323, %v1324
  %v1342 = vmax.f32 %v1325, %v1326
  %v1343 = vmax.f32 %v1327, %v1328
  %v1344 = vmax.f32 %v1329, %v1330
  %v1345 = vmax.f32 %v1331, %v1332
  %v1346 = vmax.f32 %v1333, %v1334
  %v1347 = vld [vmem:[%s3] sm:$0xff]
  %v1348 = vld [vmem:[%s3 + $0x8] sm:$0xff]
  %v1349 = vld [vmem:[%s3 + $0x10] sm:$0xff]
  %v1350 = vld [vmem:[%s3 + $0x18] sm:$0xff]
  %v1351 = vld [vmem:[%s3 + $0x20] sm:$0xff]
  %v1352 = vld [vmem:[%s3 + $0x28] sm:$0xff]
  %v1353 = vld [vmem:[%s3 + $0x30] sm:$0xff]
  %v1354 = vld [vmem:[%s3 + $0x38] sm:$0xff]
  %v1355 = vld [vmem:[%s3 + $0x40] sm:$0xff]
  %v1356 = vld [vmem:[%s3 + $0x48] sm:$0xff]
  %v1357 = vld [vmem:[%s3 + $0x50] sm:$0xff]
  %v1358 = vld [vmem:[%s3 + $0x58] sm:$0xff]
  %v1359 = vld [vmem:[%s3 + $0x60] sm:$0xff]
  %v1360 = vld [vmem:[%s3 + $0x68] sm:$0xff]
  %v1361 = vld [vmem:[%s3 + $0x70] sm:$0xff]
  %s1362 = scalar_lea.vmem %s3, 600
  %v1363 = vld [vmem:[%s1362] sm:$0xff]
  %v1364 = vld [vmem:[%s1362 + $0x8] sm:$0xff]
  %v1365 = vld [vmem:[%s1362 + $0x10] sm:$0xff]
  %v1366 = vld [vmem:[%s1362 + $0x18] sm:$0xff]
  %v1367 = vld [vmem:[%s1362 + $0x20] sm:$0xff]
  %v1368 = vld [vmem:[%s1362 + $0x28] sm:$0xff]
  %v1369 = vld [vmem:[%s1362 + $0x30] sm:$0xff]
  %v1370 = vld [vmem:[%s1362 + $0x38] sm:$0xff]
  %v1371 = vld [vmem:[%s1362 + $0x40] sm:$0xff]
  %v1372 = vld [vmem:[%s1362 + $0x48] sm:$0xff]
  %v1373 = vld [vmem:[%s1362 + $0x50] sm:$0xff]
  %v1374 = vld [vmem:[%s1362 + $0x58] sm:$0xff]
  %v1375 = vld [vmem:[%s1362 + $0x60] sm:$0xff]
  %v1376 = vld [vmem:[%s1362 + $0x68] sm:$0xff]
  %v1377 = vld [vmem:[%s1362 + $0x70] sm:$0xff]
  %s1378 = scalar_lea.vmem %s3, 120
  %v1379 = vld [vmem:[%s1378] sm:$0xff]
  %v1380 = vld [vmem:[%s1378 + $0x8] sm:$0xff]
  %v1381 = vld [vmem:[%s1378 + $0x10] sm:$0xff]
  %v1382 = vld [vmem:[%s1378 + $0x18] sm:$0xff]
  %v1383 = vld [vmem:[%s1378 + $0x20] sm:$0xff]
  %v1384 = vld [vmem:[%s1378 + $0x28] sm:$0xff]
  %v1385 = vld [vmem:[%s1378 + $0x30] sm:$0xff]
  %v1386 = vld [vmem:[%s1378 + $0x38] sm:$0xff]
  %v1387 = vld [vmem:[%s1378 + $0x40] sm:$0xff]
  %v1388 = vld [vmem:[%s1378 + $0x48] sm:$0xff]
  %v1389 = vld [vmem:[%s1378 + $0x50] sm:$0xff]
  %v1390 = vld [vmem:[%s1378 + $0x58] sm:$0xff]
  %v1391 = vld [vmem:[%s1378 + $0x60] sm:$0xff]
  %v1392 = vld [vmem:[%s1378 + $0x68] sm:$0xff]
  %v1393 = vld [vmem:[%s1378 + $0x70] sm:$0xff]
  %vm1394 = vcmask 982016
  %v1396 = vsel %vm1394, %v1336, 0
  %v1399 = vsel %vm1394, %v1337, 0
  %v1402 = vsel %vm1394, %v1338, 0
  %v1405 = vsel %vm1394, %v1339, 0
  %v1408 = vsel %vm1394, %v1340, 0
  %v1411 = vsel %vm1394, %v1341, 0
  %v1414 = vsel %vm1394, %v1342, 0
  %v1417 = vsel %vm1394, %v1343, 0
  %1419 = vmatpush.msra.mxu0 0.0
  %1420 = vmatpush.msra.mxu0 %v1393
  %1421 = vmatpush.msra.mxu0 %v1392
  %1422 = vmatpush.msra.mxu0 %v1391
  %1423 = vmatpush.msra.mxu0 %v1390
  %1424 = vmatpush.msra.mxu0 %v1389
  %1425 = vmatpush.msra.mxu0 %v1388
  %1426 = vmatpush.msra.mxu0 %v1387
  %1427 = vmatpush.msra.mxu0 %v1386
  %1428 = vmatpush.msra.mxu0 %v1385
  %1429 = vmatpush.msra.mxu0 %v1384
  %1430 = vmatpush.msra.mxu0 %v1383
  %1431 = vmatpush.msra.mxu0 %v1382
  %1432 = vmatpush.msra.mxu0 %v1381
  %1433 = vmatpush.msra.mxu0 %v1380
  %1434 = vmatpush.msra.mxu0 %v1379
  %1435 = vmatmul.f32.gmra.mxu0 %v1396
  %v1436 = vpop.f32.mrf.mxu0
  %v1437 = vadd.f32 0.0, %v1436
  %1438 = vmatmul.f32.gmra.mxu0 %v1399
  %v1439 = vpop.f32.mrf.mxu0
  %v1440 = vadd.f32 0.0, %v1439
  %1441 = vmatmul.f32.gmra.mxu0 %v1402
  %v1442 = vpop.f32.mrf.mxu0
  %v1443 = vadd.f32 0.0, %v1442
  %1444 = vmatmul.f32.gmra.mxu0 %v1405
  %v1445 = vpop.f32.mrf.mxu0
  %v1446 = vadd.f32 0.0, %v1445
  %1447 = vmatmul.f32.gmra.mxu0 %v1408
  %v1448 = vpop.f32.mrf.mxu0
  %v1449 = vadd.f32 0.0, %v1448
  %1450 = vmatmul.f32.gmra.mxu0 %v1411
  %v1451 = vpop.f32.mrf.mxu0
  %v1452 = vadd.f32 0.0, %v1451
  %1453 = vmatmul.f32.gmra.mxu0 %v1414
  %v1454 = vpop.f32.mrf.mxu0
  %v1455 = vadd.f32 0.0, %v1454
  %1456 = vmatmul.f32.gmra.mxu0 %v1417
  %v1457 = vpop.f32.mrf.mxu0
  %v1458 = vadd.f32 0.0, %v1457
  %1459 = vdwg.mxu0
  %v1461 = vsel %vm1394, %v1335, 0
  %1463 = vmatpush.msra.mxu0 0.0
  %1464 = vmatpush.msra.mxu0 %v1361
  %1465 = vmatpush.msra.mxu0 %v1360
  %1466 = vmatpush.msra.mxu0 %v1359
  %1467 = vmatpush.msra.mxu0 %v1358
  %1468 = vmatpush.msra.mxu0 %v1357
  %1469 = vmatpush.msra.mxu0 %v1356
  %1470 = vmatpush.msra.mxu0 %v1355
  %1471 = vmatpush.msra.mxu0 %v1354
  %1472 = vmatpush.msra.mxu0 %v1353
  %1473 = vmatpush.msra.mxu0 %v1352
  %1474 = vmatpush.msra.mxu0 %v1351
  %1475 = vmatpush.msra.mxu0 %v1350
  %1476 = vmatpush.msra.mxu0 %v1349
  %1477 = vmatpush.msra.mxu0 %v1348
  %1478 = vmatpush.msra.mxu0 %v1347
  %1479 = vmatmul.f32.gmra.mxu0 %v1461
  %v1480 = vpop.f32.mrf.mxu0
  %v1481 = vadd.f32 %v1437, %v1480
  %1482 = vmatmul.f32.gmra.mxu0 %v1396
  %v1483 = vpop.f32.mrf.mxu0
  %v1484 = vadd.f32 %v1440, %v1483
  %1485 = vmatmul.f32.gmra.mxu0 %v1399
  %v1486 = vpop.f32.mrf.mxu0
  %v1487 = vadd.f32 %v1443, %v1486
  %1488 = vmatmul.f32.gmra.mxu0 %v1402
  %v1489 = vpop.f32.mrf.mxu0
  %v1490 = vadd.f32 %v1446, %v1489
  %1491 = vmatmul.f32.gmra.mxu0 %v1405
  %v1492 = vpop.f32.mrf.mxu0
  %v1493 = vadd.f32 %v1449, %v1492
  %1494 = vmatmul.f32.gmra.mxu0 %v1408
  %v1495 = vpop.f32.mrf.mxu0
  %v1496 = vadd.f32 %v1452, %v1495
  %1497 = vmatmul.f32.gmra.mxu0 %v1411
  %v1498 = vpop.f32.mrf.mxu0
  %v1499 = vadd.f32 %v1455, %v1498
  %1500 = vmatmul.f32.gmra.mxu0 %v1414
  %v1501 = vpop.f32.mrf.mxu0
  %v1502 = vadd.f32 %v1458, %v1501
  %1503 = vdwg.mxu0
  %s1504 = scalar_lea.vmem %s3, 720
  %v1505 = vld [vmem:[%s1504] sm:$0xff]
  %v1506 = vld [vmem:[%s1504 + $0x8] sm:$0xff]
  %v1507 = vld [vmem:[%s1504 + $0x10] sm:$0xff]
  %v1508 = vld [vmem:[%s1504 + $0x18] sm:$0xff]
  %v1509 = vld [vmem:[%s1504 + $0x20] sm:$0xff]
  %v1510 = vld [vmem:[%s1504 + $0x28] sm:$0xff]
  %v1511 = vld [vmem:[%s1504 + $0x30] sm:$0xff]
  %v1512 = vld [vmem:[%s1504 + $0x38] sm:$0xff]
  %v1513 = vld [vmem:[%s1504 + $0x40] sm:$0xff]
  %v1514 = vld [vmem:[%s1504 + $0x48] sm:$0xff]
  %v1515 = vld [vmem:[%s1504 + $0x50] sm:$0xff]
  %v1516 = vld [vmem:[%s1504 + $0x58] sm:$0xff]
  %v1517 = vld [vmem:[%s1504 + $0x60] sm:$0xff]
  %v1518 = vld [vmem:[%s1504 + $0x68] sm:$0xff]
  %v1519 = vld [vmem:[%s1504 + $0x70] sm:$0xff]
  %1520 = vmatpush.msra.mxu0 0.0
  %1521 = vmatpush.msra.mxu0 %v1519
  %1522 = vmatpush.msra.mxu0 %v1518
  %1523 = vmatpush.msra.mxu0 %v1517
  %1524 = vmatpush.msra.mxu0 %v1516
  %1525 = vmatpush.msra.mxu0 %v1515
  %1526 = vmatpush.msra.mxu0 %v1514
  %1527 = vmatpush.msra.mxu0 %v1513
  %1528 = vmatpush.msra.mxu0 %v1512
  %1529 = vmatpush.msra.mxu0 %v1511
  %1530 = vmatpush.msra.mxu0 %v1510
  %1531 = vmatpush.msra.mxu0 %v1509
  %1532 = vmatpush.msra.mxu0 %v1508
  %1533 = vmatpush.msra.mxu0 %v1507
  %1534 = vmatpush.msra.mxu0 %v1506
  %1535 = vmatpush.msra.mxu0 %v1505
  %1536 = vmatmul.f32.gmra.mxu0 %v1396
  %v1537 = vpop.f32.mrf.mxu0
  %v1538 = vadd.f32 0.0, %v1537
  %1539 = vmatmul.f32.gmra.mxu0 %v1399
  %v1540 = vpop.f32.mrf.mxu0
  %v1541 = vadd.f32 0.0, %v1540
  %1542 = vmatmul.f32.gmra.mxu0 %v1402
  %v1543 = vpop.f32.mrf.mxu0
  %v1544 = vadd.f32 0.0, %v1543
  %1545 = vmatmul.f32.gmra.mxu0 %v1405
  %v1546 = vpop.f32.mrf.mxu0
  %v1547 = vadd.f32 0.0, %v1546
  %1548 = vmatmul.f32.gmra.mxu0 %v1408
  %v1549 = vpop.f32.mrf.mxu0
  %v1550 = vadd.f32 0.0, %v1549
  %1551 = vmatmul.f32.gmra.mxu0 %v1411
  %v1552 = vpop.f32.mrf.mxu0
  %v1553 = vadd.f32 0.0, %v1552
  %1554 = vmatmul.f32.gmra.mxu0 %v1414
  %v1555 = vpop.f32.mrf.mxu0
  %v1556 = vadd.f32 0.0, %v1555
  %1557 = vmatmul.f32.gmra.mxu0 %v1417
  %v1558 = vpop.f32.mrf.mxu0
  %v1559 = vadd.f32 0.0, %v1558
  %1560 = vdwg.mxu0
  %1561 = vmatpush.msra.mxu0 0.0
  %1562 = vmatpush.msra.mxu0 %v1377
  %1563 = vmatpush.msra.mxu0 %v1376
  %1564 = vmatpush.msra.mxu0 %v1375
  %1565 = vmatpush.msra.mxu0 %v1374
  %1566 = vmatpush.msra.mxu0 %v1373
  %1567 = vmatpush.msra.mxu0 %v1372
  %1568 = vmatpush.msra.mxu0 %v1371
  %1569 = vmatpush.msra.mxu0 %v1370
  %1570 = vmatpush.msra.mxu0 %v1369
  %1571 = vmatpush.msra.mxu0 %v1368
  %1572 = vmatpush.msra.mxu0 %v1367
  %1573 = vmatpush.msra.mxu0 %v1366
  %1574 = vmatpush.msra.mxu0 %v1365
  %1575 = vmatpush.msra.mxu0 %v1364
  %1576 = vmatpush.msra.mxu0 %v1363
  %1577 = vmatmul.f32.gmra.mxu0 %v1461
  %v1578 = vpop.f32.mrf.mxu0
  %v1579 = vadd.f32 %v1538, %v1578
  %1580 = vmatmul.f32.gmra.mxu0 %v1396
  %v1581 = vpop.f32.mrf.mxu0
  %v1582 = vadd.f32 %v1541, %v1581
  %1583 = vmatmul.f32.gmra.mxu0 %v1399
  %v1584 = vpop.f32.mrf.mxu0
  %v1585 = vadd.f32 %v1544, %v1584
  %1586 = vmatmul.f32.gmra.mxu0 %v1402
  %v1587 = vpop.f32.mrf.mxu0
  %v1588 = vadd.f32 %v1547, %v1587
  %1589 = vmatmul.f32.gmra.mxu0 %v1405
  %v1590 = vpop.f32.mrf.mxu0
  %v1591 = vadd.f32 %v1550, %v1590
  %1592 = vmatmul.f32.gmra.mxu0 %v1408
  %v1593 = vpop.f32.mrf.mxu0
  %v1594 = vadd.f32 %v1553, %v1593
  %1595 = vmatmul.f32.gmra.mxu0 %v1411
  %v1596 = vpop.f32.mrf.mxu0
  %v1597 = vadd.f32 %v1556, %v1596
  %1598 = vmatmul.f32.gmra.mxu0 %v1414
  %v1599 = vpop.f32.mrf.mxu0
  %v1600 = vadd.f32 %v1559, %v1599
  %1601 = vdwg.mxu0
  %s1602 = scalar_lea.vmem %s3, 240
  %v1603 = vld [vmem:[%s1602] sm:$0xff]
  %v1604 = vld [vmem:[%s1602 + $0x8] sm:$0xff]
  %v1605 = vld [vmem:[%s1602 + $0x10] sm:$0xff]
  %v1606 = vld [vmem:[%s1602 + $0x18] sm:$0xff]
  %v1607 = vld [vmem:[%s1602 + $0x20] sm:$0xff]
  %v1608 = vld [vmem:[%s1602 + $0x28] sm:$0xff]
  %v1609 = vld [vmem:[%s1602 + $0x30] sm:$0xff]
  %v1610 = vld [vmem:[%s1602 + $0x38] sm:$0xff]
  %v1611 = vld [vmem:[%s1602 + $0x40] sm:$0xff]
  %v1612 = vld [vmem:[%s1602 + $0x48] sm:$0xff]
  %v1613 = vld [vmem:[%s1602 + $0x50] sm:$0xff]
  %v1614 = vld [vmem:[%s1602 + $0x58] sm:$0xff]
  %v1615 = vld [vmem:[%s1602 + $0x60] sm:$0xff]
  %v1616 = vld [vmem:[%s1602 + $0x68] sm:$0xff]
  %v1617 = vld [vmem:[%s1602 + $0x70] sm:$0xff]
  %v1619 = vsel %vm1394, %v1344, 0
  %1621 = vmatpush.msra.mxu0 0.0
  %1622 = vmatpush.msra.mxu0 %v1617
  %1623 = vmatpush.msra.mxu0 %v1616
  %1624 = vmatpush.msra.mxu0 %v1615
  %1625 = vmatpush.msra.mxu0 %v1614
  %1626 = vmatpush.msra.mxu0 %v1613
  %1627 = vmatpush.msra.mxu0 %v1612
  %1628 = vmatpush.msra.mxu0 %v1611
  %1629 = vmatpush.msra.mxu0 %v1610
  %1630 = vmatpush.msra.mxu0 %v1609
  %1631 = vmatpush.msra.mxu0 %v1608
  %1632 = vmatpush.msra.mxu0 %v1607
  %1633 = vmatpush.msra.mxu0 %v1606
  %1634 = vmatpush.msra.mxu0 %v1605
  %1635 = vmatpush.msra.mxu0 %v1604
  %1636 = vmatpush.msra.mxu0 %v1603
  %1637 = vmatmul.f32.gmra.mxu0 %v1399
  %v1638 = vpop.f32.mrf.mxu0
  %v1639 = vadd.f32 0.0, %v1638
  %1640 = vmatmul.f32.gmra.mxu0 %v1402
  %v1641 = vpop.f32.mrf.mxu0
  %v1642 = vadd.f32 0.0, %v1641
  %1643 = vmatmul.f32.gmra.mxu0 %v1405
  %v1644 = vpop.f32.mrf.mxu0
  %v1645 = vadd.f32 0.0, %v1644
  %1646 = vmatmul.f32.gmra.mxu0 %v1408
  %v1647 = vpop.f32.mrf.mxu0
  %v1648 = vadd.f32 0.0, %v1647
  %1649 = vmatmul.f32.gmra.mxu0 %v1411
  %v1650 = vpop.f32.mrf.mxu0
  %v1651 = vadd.f32 0.0, %v1650
  %1652 = vmatmul.f32.gmra.mxu0 %v1414
  %v1653 = vpop.f32.mrf.mxu0
  %v1654 = vadd.f32 0.0, %v1653
  %1655 = vmatmul.f32.gmra.mxu0 %v1417
  %v1656 = vpop.f32.mrf.mxu0
  %v1657 = vadd.f32 0.0, %v1656
  %1658 = vmatmul.f32.gmra.mxu0 %v1619
  %v1659 = vpop.f32.mrf.mxu0
  %v1660 = vadd.f32 0.0, %v1659
  %1661 = vdwg.mxu0
  %v1662 = vadd.f32 %v1481, %v1639
  %v1663 = vadd.f32 %v1484, %v1642
  %v1664 = vadd.f32 %v1487, %v1645
  %v1665 = vadd.f32 %v1490, %v1648
  %v1666 = vadd.f32 %v1493, %v1651
  %v1667 = vadd.f32 %v1496, %v1654
  %v1668 = vadd.f32 %v1499, %v1657
  %v1669 = vadd.f32 %v1502, %v1660
  %s1670 = scalar_lea.vmem %s3, 840
  %v1671 = vld [vmem:[%s1670] sm:$0xff]
  %v1672 = vld [vmem:[%s1670 + $0x8] sm:$0xff]
  %v1673 = vld [vmem:[%s1670 + $0x10] sm:$0xff]
  %v1674 = vld [vmem:[%s1670 + $0x18] sm:$0xff]
  %v1675 = vld [vmem:[%s1670 + $0x20] sm:$0xff]
  %v1676 = vld [vmem:[%s1670 + $0x28] sm:$0xff]
  %v1677 = vld [vmem:[%s1670 + $0x30] sm:$0xff]
  %v1678 = vld [vmem:[%s1670 + $0x38] sm:$0xff]
  %v1679 = vld [vmem:[%s1670 + $0x40] sm:$0xff]
  %v1680 = vld [vmem:[%s1670 + $0x48] sm:$0xff]
  %v1681 = vld [vmem:[%s1670 + $0x50] sm:$0xff]
  %v1682 = vld [vmem:[%s1670 + $0x58] sm:$0xff]
  %v1683 = vld [vmem:[%s1670 + $0x60] sm:$0xff]
  %v1684 = vld [vmem:[%s1670 + $0x68] sm:$0xff]
  %v1685 = vld [vmem:[%s1670 + $0x70] sm:$0xff]
  %1686 = vmatpush.msra.mxu0 0.0
  %1687 = vmatpush.msra.mxu0 %v1685
  %1688 = vmatpush.msra.mxu0 %v1684
  %1689 = vmatpush.msra.mxu0 %v1683
  %1690 = vmatpush.msra.mxu0 %v1682
  %1691 = vmatpush.msra.mxu0 %v1681
  %1692 = vmatpush.msra.mxu0 %v1680
  %1693 = vmatpush.msra.mxu0 %v1679
  %1694 = vmatpush.msra.mxu0 %v1678
  %1695 = vmatpush.msra.mxu0 %v1677
  %1696 = vmatpush.msra.mxu0 %v1676
  %1697 = vmatpush.msra.mxu0 %v1675
  %1698 = vmatpush.msra.mxu0 %v1674
  %1699 = vmatpush.msra.mxu0 %v1673
  %1700 = vmatpush.msra.mxu0 %v1672
  %1701 = vmatpush.msra.mxu0 %v1671
  %1702 = vmatmul.f32.gmra.mxu0 %v1399
  %v1703 = vpop.f32.mrf.mxu0
  %v1704 = vadd.f32 0.0, %v1703
  %1705 = vmatmul.f32.gmra.mxu0 %v1402
  %v1706 = vpop.f32.mrf.mxu0
  %v1707 = vadd.f32 0.0, %v1706
  %1708 = vmatmul.f32.gmra.mxu0 %v1405
  %v1709 = vpop.f32.mrf.mxu0
  %v1710 = vadd.f32 0.0, %v1709
  %1711 = vmatmul.f32.gmra.mxu0 %v1408
  %v1712 = vpop.f32.mrf.mxu0
  %v1713 = vadd.f32 0.0, %v1712
  %1714 = vmatmul.f32.gmra.mxu0 %v1411
  %v1715 = vpop.f32.mrf.mxu0
  %v1716 = vadd.f32 0.0, %v1715
  %1717 = vmatmul.f32.gmra.mxu0 %v1414
  %v1718 = vpop.f32.mrf.mxu0
  %v1719 = vadd.f32 0.0, %v1718
  %1720 = vmatmul.f32.gmra.mxu0 %v1417
  %v1721 = vpop.f32.mrf.mxu0
  %v1722 = vadd.f32 0.0, %v1721
  %1723 = vmatmul.f32.gmra.mxu0 %v1619
  %v1724 = vpop.f32.mrf.mxu0
  %v1725 = vadd.f32 0.0, %v1724
  %1726 = vdwg.mxu0
  %v1727 = vadd.f32 %v1579, %v1704
  %v1728 = vadd.f32 %v1582, %v1707
  %v1729 = vadd.f32 %v1585, %v1710
  %v1730 = vadd.f32 %v1588, %v1713
  %v1731 = vadd.f32 %v1591, %v1716
  %v1732 = vadd.f32 %v1594, %v1719
  %v1733 = vadd.f32 %v1597, %v1722
  %v1734 = vadd.f32 %v1600, %v1725
  %s1735 = scalar_lea.vmem %s3, 360
  %v1736 = vld [vmem:[%s1735] sm:$0xff]
  %v1737 = vld [vmem:[%s1735 + $0x8] sm:$0xff]
  %v1738 = vld [vmem:[%s1735 + $0x10] sm:$0xff]
  %v1739 = vld [vmem:[%s1735 + $0x18] sm:$0xff]
  %v1740 = vld [vmem:[%s1735 + $0x20] sm:$0xff]
  %v1741 = vld [vmem:[%s1735 + $0x28] sm:$0xff]
  %v1742 = vld [vmem:[%s1735 + $0x30] sm:$0xff]
  %v1743 = vld [vmem:[%s1735 + $0x38] sm:$0xff]
  %v1744 = vld [vmem:[%s1735 + $0x40] sm:$0xff]
  %v1745 = vld [vmem:[%s1735 + $0x48] sm:$0xff]
  %v1746 = vld [vmem:[%s1735 + $0x50] sm:$0xff]
  %v1747 = vld [vmem:[%s1735 + $0x58] sm:$0xff]
  %v1748 = vld [vmem:[%s1735 + $0x60] sm:$0xff]
  %v1749 = vld [vmem:[%s1735 + $0x68] sm:$0xff]
  %v1750 = vld [vmem:[%s1735 + $0x70] sm:$0xff]
  %v1752 = vsel %vm1394, %v1345, 0
  %1754 = vmatpush.msra.mxu0 0.0
  %1755 = vmatpush.msra.mxu0 %v1750
  %1756 = vmatpush.msra.mxu0 %v1749
  %1757 = vmatpush.msra.mxu0 %v1748
  %1758 = vmatpush.msra.mxu0 %v1747
  %1759 = vmatpush.msra.mxu0 %v1746
  %1760 = vmatpush.msra.mxu0 %v1745
  %1761 = vmatpush.msra.mxu0 %v1744
  %1762 = vmatpush.msra.mxu0 %v1743
  %1763 = vmatpush.msra.mxu0 %v1742
  %1764 = vmatpush.msra.mxu0 %v1741
  %1765 = vmatpush.msra.mxu0 %v1740
  %1766 = vmatpush.msra.mxu0 %v1739
  %1767 = vmatpush.msra.mxu0 %v1738
  %1768 = vmatpush.msra.mxu0 %v1737
  %1769 = vmatpush.msra.mxu0 %v1736
  %1770 = vmatmul.f32.gmra.mxu0 %v1402
  %v1771 = vpop.f32.mrf.mxu0
  %v1772 = vadd.f32 0.0, %v1771
  %1773 = vmatmul.f32.gmra.mxu0 %v1405
  %v1774 = vpop.f32.mrf.mxu0
  %v1775 = vadd.f32 0.0, %v1774
  %1776 = vmatmul.f32.gmra.mxu0 %v1408
  %v1777 = vpop.f32.mrf.mxu0
  %v1778 = vadd.f32 0.0, %v1777
  %1779 = vmatmul.f32.gmra.mxu0 %v1411
  %v1780 = vpop.f32.mrf.mxu0
  %v1781 = vadd.f32 0.0, %v1780
  %1782 = vmatmul.f32.gmra.mxu0 %v1414
  %v1783 = vpop.f32.mrf.mxu0
  %v1784 = vadd.f32 0.0, %v1783
  %1785 = vmatmul.f32.gmra.mxu0 %v1417
  %v1786 = vpop.f32.mrf.mxu0
  %v1787 = vadd.f32 0.0, %v1786
  %1788 = vmatmul.f32.gmra.mxu0 %v1619
  %v1789 = vpop.f32.mrf.mxu0
  %v1790 = vadd.f32 0.0, %v1789
  %1791 = vmatmul.f32.gmra.mxu0 %v1752
  %v1792 = vpop.f32.mrf.mxu0
  %v1793 = vadd.f32 0.0, %v1792
  %1794 = vdwg.mxu0
  %v1795 = vadd.f32 %v1662, %v1772
  %v1796 = vadd.f32 %v1663, %v1775
  %v1797 = vadd.f32 %v1664, %v1778
  %v1798 = vadd.f32 %v1665, %v1781
  %v1799 = vadd.f32 %v1666, %v1784
  %v1800 = vadd.f32 %v1667, %v1787
  %v1801 = vadd.f32 %v1668, %v1790
  %v1802 = vadd.f32 %v1669, %v1793
  %s1803 = scalar_lea.vmem %s3, 960
  %v1804 = vld [vmem:[%s1803] sm:$0xff]
  %v1805 = vld [vmem:[%s1803 + $0x8] sm:$0xff]
  %v1806 = vld [vmem:[%s1803 + $0x10] sm:$0xff]
  %v1807 = vld [vmem:[%s1803 + $0x18] sm:$0xff]
  %v1808 = vld [vmem:[%s1803 + $0x20] sm:$0xff]
  %v1809 = vld [vmem:[%s1803 + $0x28] sm:$0xff]
  %v1810 = vld [vmem:[%s1803 + $0x30] sm:$0xff]
  %v1811 = vld [vmem:[%s1803 + $0x38] sm:$0xff]
  %v1812 = vld [vmem:[%s1803 + $0x40] sm:$0xff]
  %v1813 = vld [vmem:[%s1803 + $0x48] sm:$0xff]
  %v1814 = vld [vmem:[%s1803 + $0x50] sm:$0xff]
  %v1815 = vld [vmem:[%s1803 + $0x58] sm:$0xff]
  %v1816 = vld [vmem:[%s1803 + $0x60] sm:$0xff]
  %v1817 = vld [vmem:[%s1803 + $0x68] sm:$0xff]
  %v1818 = vld [vmem:[%s1803 + $0x70] sm:$0xff]
  %1819 = vmatpush.msra.mxu0 0.0
  %1820 = vmatpush.msra.mxu0 %v1818
  %1821 = vmatpush.msra.mxu0 %v1817
  %1822 = vmatpush.msra.mxu0 %v1816
  %1823 = vmatpush.msra.mxu0 %v1815
  %1824 = vmatpush.msra.mxu0 %v1814
  %1825 = vmatpush.msra.mxu0 %v1813
  %1826 = vmatpush.msra.mxu0 %v1812
  %1827 = vmatpush.msra.mxu0 %v1811
  %1828 = vmatpush.msra.mxu0 %v1810
  %1829 = vmatpush.msra.mxu0 %v1809
  %1830 = vmatpush.msra.mxu0 %v1808
  %1831 = vmatpush.msra.mxu0 %v1807
  %1832 = vmatpush.msra.mxu0 %v1806
  %1833 = vmatpush.msra.mxu0 %v1805
  %1834 = vmatpush.msra.mxu0 %v1804
  %1835 = vmatmul.f32.gmra.mxu0 %v1402
  %v1836 = vpop.f32.mrf.mxu0
  %v1837 = vadd.f32 0.0, %v1836
  %1838 = vmatmul.f32.gmra.mxu0 %v1405
  %v1839 = vpop.f32.mrf.mxu0
  %v1840 = vadd.f32 0.0, %v1839
  %1841 = vmatmul.f32.gmra.mxu0 %v1408
  %v1842 = vpop.f32.mrf.mxu0
  %v1843 = vadd.f32 0.0, %v1842
  %1844 = vmatmul.f32.gmra.mxu0 %v1411
  %v1845 = vpop.f32.mrf.mxu0
  %v1846 = vadd.f32 0.0, %v1845
  %1847 = vmatmul.f32.gmra.mxu0 %v1414
  %v1848 = vpop.f32.mrf.mxu0
  %v1849 = vadd.f32 0.0, %v1848
  %1850 = vmatmul.f32.gmra.mxu0 %v1417
  %v1851 = vpop.f32.mrf.mxu0
  %v1852 = vadd.f32 0.0, %v1851
  %1853 = vmatmul.f32.gmra.mxu0 %v1619
  %v1854 = vpop.f32.mrf.mxu0
  %v1855 = vadd.f32 0.0, %v1854
  %1856 = vmatmul.f32.gmra.mxu0 %v1752
  %v1857 = vpop.f32.mrf.mxu0
  %v1858 = vadd.f32 0.0, %v1857
  %1859 = vdwg.mxu0
  %v1860 = vadd.f32 %v1727, %v1837
  %v1861 = vadd.f32 %v1728, %v1840
  %v1862 = vadd.f32 %v1729, %v1843
  %v1863 = vadd.f32 %v1730, %v1846
  %v1864 = vadd.f32 %v1731, %v1849
  %v1865 = vadd.f32 %v1732, %v1852
  %v1866 = vadd.f32 %v1733, %v1855
  %v1867 = vadd.f32 %v1734, %v1858
  %s1868 = scalar_lea.vmem %s3, 480
  %v1869 = vld [vmem:[%s1868] sm:$0xff]
  %v1870 = vld [vmem:[%s1868 + $0x8] sm:$0xff]
  %v1871 = vld [vmem:[%s1868 + $0x10] sm:$0xff]
  %v1872 = vld [vmem:[%s1868 + $0x18] sm:$0xff]
  %v1873 = vld [vmem:[%s1868 + $0x20] sm:$0xff]
  %v1874 = vld [vmem:[%s1868 + $0x28] sm:$0xff]
  %v1875 = vld [vmem:[%s1868 + $0x30] sm:$0xff]
  %v1876 = vld [vmem:[%s1868 + $0x38] sm:$0xff]
  %v1877 = vld [vmem:[%s1868 + $0x40] sm:$0xff]
  %v1878 = vld [vmem:[%s1868 + $0x48] sm:$0xff]
  %v1879 = vld [vmem:[%s1868 + $0x50] sm:$0xff]
  %v1880 = vld [vmem:[%s1868 + $0x58] sm:$0xff]
  %v1881 = vld [vmem:[%s1868 + $0x60] sm:$0xff]
  %v1882 = vld [vmem:[%s1868 + $0x68] sm:$0xff]
  %v1883 = vld [vmem:[%s1868 + $0x70] sm:$0xff]
  %v1885 = vsel %vm1394, %v1346, 0
  %1887 = vmatpush.msra.mxu0 0.0
  %1888 = vmatpush.msra.mxu0 %v1883
  %1889 = vmatpush.msra.mxu0 %v1882
  %1890 = vmatpush.msra.mxu0 %v1881
  %1891 = vmatpush.msra.mxu0 %v1880
  %1892 = vmatpush.msra.mxu0 %v1879
  %1893 = vmatpush.msra.mxu0 %v1878
  %1894 = vmatpush.msra.mxu0 %v1877
  %1895 = vmatpush.msra.mxu0 %v1876
  %1896 = vmatpush.msra.mxu0 %v1875
  %1897 = vmatpush.msra.mxu0 %v1874
  %1898 = vmatpush.msra.mxu0 %v1873
  %1899 = vmatpush.msra.mxu0 %v1872
  %1900 = vmatpush.msra.mxu0 %v1871
  %1901 = vmatpush.msra.mxu0 %v1870
  %1902 = vmatpush.msra.mxu0 %v1869
  %1903 = vmatmul.f32.gmra.mxu0 %v1405
  %v1904 = vpop.f32.mrf.mxu0
  %v1905 = vadd.f32 0.0, %v1904
  %1906 = vmatmul.f32.gmra.mxu0 %v1408
  %v1907 = vpop.f32.mrf.mxu0
  %v1908 = vadd.f32 0.0, %v1907
  %1909 = vmatmul.f32.gmra.mxu0 %v1411
  %v1910 = vpop.f32.mrf.mxu0
  %v1911 = vadd.f32 0.0, %v1910
  %1912 = vmatmul.f32.gmra.mxu0 %v1414
  %v1913 = vpop.f32.mrf.mxu0
  %v1914 = vadd.f32 0.0, %v1913
  %1915 = vmatmul.f32.gmra.mxu0 %v1417
  %v1916 = vpop.f32.mrf.mxu0
  %v1917 = vadd.f32 0.0, %v1916
  %1918 = vmatmul.f32.gmra.mxu0 %v1619
  %v1919 = vpop.f32.mrf.mxu0
  %v1920 = vadd.f32 0.0, %v1919
  %1921 = vmatmul.f32.gmra.mxu0 %v1752
  %v1922 = vpop.f32.mrf.mxu0
  %v1923 = vadd.f32 0.0, %v1922
  %1924 = vmatmul.f32.gmra.mxu0 %v1885
  %v1925 = vpop.f32.mrf.mxu0
  %v1926 = vadd.f32 0.0, %v1925
  %1927 = vdwg.mxu0
  %v1928 = vadd.f32 %v1795, %v1905
  %v1929 = vadd.f32 %v1796, %v1908
  %v1930 = vadd.f32 %v1797, %v1911
  %v1931 = vadd.f32 %v1798, %v1914
  %v1932 = vadd.f32 %v1799, %v1917
  %v1933 = vadd.f32 %v1800, %v1920
  %v1934 = vadd.f32 %v1801, %v1923
  %v1935 = vadd.f32 %v1802, %v1926
  %s1936 = scalar_lea.vmem %s3, 1080
  %v1937 = vld [vmem:[%s1936] sm:$0xff]
  %v1938 = vld [vmem:[%s1936 + $0x8] sm:$0xff]
  %v1939 = vld [vmem:[%s1936 + $0x10] sm:$0xff]
  %v1940 = vld [vmem:[%s1936 + $0x18] sm:$0xff]
  %v1941 = vld [vmem:[%s1936 + $0x20] sm:$0xff]
  %v1942 = vld [vmem:[%s1936 + $0x28] sm:$0xff]
  %v1943 = vld [vmem:[%s1936 + $0x30] sm:$0xff]
  %v1944 = vld [vmem:[%s1936 + $0x38] sm:$0xff]
  %v1945 = vld [vmem:[%s1936 + $0x40] sm:$0xff]
  %v1946 = vld [vmem:[%s1936 + $0x48] sm:$0xff]
  %v1947 = vld [vmem:[%s1936 + $0x50] sm:$0xff]
  %v1948 = vld [vmem:[%s1936 + $0x58] sm:$0xff]
  %v1949 = vld [vmem:[%s1936 + $0x60] sm:$0xff]
  %v1950 = vld [vmem:[%s1936 + $0x68] sm:$0xff]
  %v1951 = vld [vmem:[%s1936 + $0x70] sm:$0xff]
  %1952 = vmatpush.msra.mxu0 0.0
  %1953 = vmatpush.msra.mxu0 %v1951
  %1954 = vmatpush.msra.mxu0 %v1950
  %1955 = vmatpush.msra.mxu0 %v1949
  %1956 = vmatpush.msra.mxu0 %v1948
  %1957 = vmatpush.msra.mxu0 %v1947
  %1958 = vmatpush.msra.mxu0 %v1946
  %1959 = vmatpush.msra.mxu0 %v1945
  %1960 = vmatpush.msra.mxu0 %v1944
  %1961 = vmatpush.msra.mxu0 %v1943
  %1962 = vmatpush.msra.mxu0 %v1942
  %1963 = vmatpush.msra.mxu0 %v1941
  %1964 = vmatpush.msra.mxu0 %v1940
  %1965 = vmatpush.msra.mxu0 %v1939
  %1966 = vmatpush.msra.mxu0 %v1938
  %1967 = vmatpush.msra.mxu0 %v1937
  %1968 = vmatmul.f32.gmra.mxu0 %v1405
  %v1969 = vpop.f32.mrf.mxu0
  %v1970 = vadd.f32 0.0, %v1969
  %1971 = vmatmul.f32.gmra.mxu0 %v1408
  %v1972 = vpop.f32.mrf.mxu0
  %v1973 = vadd.f32 0.0, %v1972
  %1974 = vmatmul.f32.gmra.mxu0 %v1411
  %v1975 = vpop.f32.mrf.mxu0
  %v1976 = vadd.f32 0.0, %v1975
  %1977 = vmatmul.f32.gmra.mxu0 %v1414
  %v1978 = vpop.f32.mrf.mxu0
  %v1979 = vadd.f32 0.0, %v1978
  %1980 = vmatmul.f32.gmra.mxu0 %v1417
  %v1981 = vpop.f32.mrf.mxu0
  %v1982 = vadd.f32 0.0, %v1981
  %1983 = vmatmul.f32.gmra.mxu0 %v1619
  %v1984 = vpop.f32.mrf.mxu0
  %v1985 = vadd.f32 0.0, %v1984
  %1986 = vmatmul.f32.gmra.mxu0 %v1752
  %v1987 = vpop.f32.mrf.mxu0
  %v1988 = vadd.f32 0.0, %v1987
  %1989 = vmatmul.f32.gmra.mxu0 %v1885
  %v1990 = vpop.f32.mrf.mxu0
  %v1991 = vadd.f32 0.0, %v1990
  %1992 = vdwg.mxu0
  %v1993 = vadd.f32 %v1860, %v1970
  %v1994 = vadd.f32 %v1861, %v1973
  %v1995 = vadd.f32 %v1862, %v1976
  %v1996 = vadd.f32 %v1863, %v1979
  %v1997 = vadd.f32 %v1864, %v1982
  %v1998 = vadd.f32 %v1865, %v1985
  %v1999 = vadd.f32 %v1866, %v1988
  %v2000 = vadd.f32 %v1867, %v1991
  %v2001 = vmax.f32 %v1928, %v1993
  %v2002 = vmax.f32 %v1929, %v1994
  %v2003 = vmax.f32 %v1930, %v1995
  %v2004 = vmax.f32 %v1931, %v1996
  %v2005 = vmax.f32 %v1932, %v1997
  %v2006 = vmax.f32 %v1933, %v1998
  %v2007 = vmax.f32 %v1934, %v1999
  %v2008 = vmax.f32 %v1935, %v2000
  %v2009 = vld [vmem:[%s4] sm:$0x1]
  %v2011 = vperm.slane %v2009, 0
  %v2013 = vadd.f32 %v2001, %v2011
  %v2014 = vadd.f32 %v2002, %v2011
  %v2015 = vadd.f32 %v2003, %v2011
  %v2016 = vadd.f32 %v2004, %v2011
  %v2017 = vadd.f32 %v2005, %v2011
  %v2018 = vadd.f32 %v2006, %v2011
  %v2019 = vadd.f32 %v2007, %v2011
  %v2020 = vadd.f32 %v2008, %v2011
  %v2021 = vmax.f32 %v2013, 0.0
  %v2022 = vmax.f32 %v2014, 0.0
  %v2023 = vmax.f32 %v2015, 0.0
  %v2024 = vmax.f32 %v2016, 0.0
  %v2025 = vmax.f32 %v2017, 0.0
  %v2026 = vmax.f32 %v2018, 0.0
  %v2027 = vmax.f32 %v2019, 0.0
  %v2028 = vmax.f32 %v2020, 0.0
  %v2029 = vmax.f32 %v2021, %v2022
  %v2030 = vmax.f32 %v2023, %v2024
  %v2031 = vmax.f32 %v2025, %v2026
  %v2032 = vmax.f32 %v2027, %v2028
  %v2033 = vld [vmem:[%s5] sm:$0xff]
  %v2034 = vld [vmem:[%s5 + $0x8] sm:$0xff]
  %v2035 = vld [vmem:[%s5 + $0x10] sm:$0xff]
  %v2036 = vld [vmem:[%s5 + $0x18] sm:$0xff]
  %v2037 = vld [vmem:[%s5 + $0x20] sm:$0xff]
  %v2038 = vld [vmem:[%s5 + $0x28] sm:$0xff]
  %v2039 = vld [vmem:[%s5 + $0x30] sm:$0xff]
  %v2040 = vld [vmem:[%s5 + $0x38] sm:$0xff]
  %v2041 = vld [vmem:[%s5 + $0x40] sm:$0xff]
  %v2042 = vld [vmem:[%s5 + $0x48] sm:$0xff]
  %s2043 = scalar_lea.vmem %s5, 80
  %v2044 = vld [vmem:[%s2043] sm:$0xff]
  %v2045 = vld [vmem:[%s2043 + $0x8] sm:$0xff]
  %v2046 = vld [vmem:[%s2043 + $0x10] sm:$0xff]
  %v2047 = vld [vmem:[%s2043 + $0x18] sm:$0xff]
  %v2048 = vld [vmem:[%s2043 + $0x20] sm:$0xff]
  %v2049 = vld [vmem:[%s2043 + $0x28] sm:$0xff]
  %v2050 = vld [vmem:[%s2043 + $0x30] sm:$0xff]
  %v2051 = vld [vmem:[%s2043 + $0x38] sm:$0xff]
  %v2052 = vld [vmem:[%s2043 + $0x40] sm:$0xff]
  %v2053 = vld [vmem:[%s2043 + $0x48] sm:$0xff]
  %vm2054 = vcmask 654336
  %v2056 = vsel %vm2054, %v2030, 0
  %2058 = vmatpush.msra.mxu0 0.0
  %2059 = vmatpush.msra.mxu0 0.0
  %2060 = vmatpush.msra.mxu0 0.0
  %2061 = vmatpush.msra.mxu0 0.0
  %2062 = vmatpush.msra.mxu0 0.0
  %2063 = vmatpush.msra.mxu0 0.0
  %2064 = vmatpush.msra.mxu0 %v2053
  %2065 = vmatpush.msra.mxu0 %v2052
  %2066 = vmatpush.msra.mxu0 %v2051
  %2067 = vmatpush.msra.mxu0 %v2050
  %2068 = vmatpush.msra.mxu0 %v2049
  %2069 = vmatpush.msra.mxu0 %v2048
  %2070 = vmatpush.msra.mxu0 %v2047
  %2071 = vmatpush.msra.mxu0 %v2046
  %2072 = vmatpush.msra.mxu0 %v2045
  %2073 = vmatpush.msra.mxu0 %v2044
  %2074 = vmatmul.f32.gmra.mxu0 %v2056
  %v2075 = vpop.f32.mrf.mxu0
  %v2076 = vadd.f32 0.0, %v2075
  %2077 = vdwg.mxu0
  %v2079 = vsel %vm2054, %v2029, 0
  %2081 = vmatpush.msra.mxu0 0.0
  %2082 = vmatpush.msra.mxu0 0.0
  %2083 = vmatpush.msra.mxu0 0.0
  %2084 = vmatpush.msra.mxu0 0.0
  %2085 = vmatpush.msra.mxu0 0.0
  %2086 = vmatpush.msra.mxu0 0.0
  %2087 = vmatpush.msra.mxu0 %v2042
  %2088 = vmatpush.msra.mxu0 %v2041
  %2089 = vmatpush.msra.mxu0 %v2040
  %2090 = vmatpush.msra.mxu0 %v2039
  %2091 = vmatpush.msra.mxu0 %v2038
  %2092 = vmatpush.msra.mxu0 %v2037
  %2093 = vmatpush.msra.mxu0 %v2036
  %2094 = vmatpush.msra.mxu0 %v2035
  %2095 = vmatpush.msra.mxu0 %v2034
  %2096 = vmatpush.msra.mxu0 %v2033
  %2097 = vmatmul.f32.gmra.mxu0 %v2079
  %v2098 = vpop.f32.mrf.mxu0
  %v2099 = vadd.f32 %v2076, %v2098
  %2100 = vdwg.mxu0
  %s2101 = scalar_lea.vmem %s5, 160
  %v2102 = vld [vmem:[%s2101] sm:$0xff]
  %v2103 = vld [vmem:[%s2101 + $0x8] sm:$0xff]
  %v2104 = vld [vmem:[%s2101 + $0x10] sm:$0xff]
  %v2105 = vld [vmem:[%s2101 + $0x18] sm:$0xff]
  %v2106 = vld [vmem:[%s2101 + $0x20] sm:$0xff]
  %v2107 = vld [vmem:[%s2101 + $0x28] sm:$0xff]
  %v2108 = vld [vmem:[%s2101 + $0x30] sm:$0xff]
  %v2109 = vld [vmem:[%s2101 + $0x38] sm:$0xff]
  %v2110 = vld [vmem:[%s2101 + $0x40] sm:$0xff]
  %v2111 = vld [vmem:[%s2101 + $0x48] sm:$0xff]
  %v2113 = vsel %vm2054, %v2031, 0
  %2115 = vmatpush.msra.mxu0 0.0
  %2116 = vmatpush.msra.mxu0 0.0
  %2117 = vmatpush.msra.mxu0 0.0
  %2118 = vmatpush.msra.mxu0 0.0
  %2119 = vmatpush.msra.mxu0 0.0
  %2120 = vmatpush.msra.mxu0 0.0
  %2121 = vmatpush.msra.mxu0 %v2111
  %2122 = vmatpush.msra.mxu0 %v2110
  %2123 = vmatpush.msra.mxu0 %v2109
  %2124 = vmatpush.msra.mxu0 %v2108
  %2125 = vmatpush.msra.mxu0 %v2107
  %2126 = vmatpush.msra.mxu0 %v2106
  %2127 = vmatpush.msra.mxu0 %v2105
  %2128 = vmatpush.msra.mxu0 %v2104
  %2129 = vmatpush.msra.mxu0 %v2103
  %2130 = vmatpush.msra.mxu0 %v2102
  %2131 = vmatmul.f32.gmra.mxu0 %v2113
  %v2132 = vpop.f32.mrf.mxu0
  %v2133 = vadd.f32 0.0, %v2132
  %2134 = vdwg.mxu0
  %v2135 = vadd.f32 %v2099, %v2133
  %s2136 = scalar_lea.vmem %s5, 240
  %v2137 = vld [vmem:[%s2136] sm:$0xff]
  %v2138 = vld [vmem:[%s2136 + $0x8] sm:$0xff]
  %v2139 = vld [vmem:[%s2136 + $0x10] sm:$0xff]
  %v2140 = vld [vmem:[%s2136 + $0x18] sm:$0xff]
  %v2141 = vld [vmem:[%s2136 + $0x20] sm:$0xff]
  %v2142 = vld [vmem:[%s2136 + $0x28] sm:$0xff]
  %v2143 = vld [vmem:[%s2136 + $0x30] sm:$0xff]
  %v2144 = vld [vmem:[%s2136 + $0x38] sm:$0xff]
  %v2145 = vld [vmem:[%s2136 + $0x40] sm:$0xff]
  %v2146 = vld [vmem:[%s2136 + $0x48] sm:$0xff]
  %v2148 = vsel %vm2054, %v2032, 0
  %2150 = vmatpush.msra.mxu0 0.0
  %2151 = vmatpush.msra.mxu0 0.0
  %2152 = vmatpush.msra.mxu0 0.0
  %2153 = vmatpush.msra.mxu0 0.0
  %2154 = vmatpush.msra.mxu0 0.0
  %2155 = vmatpush.msra.mxu0 0.0
  %2156 = vmatpush.msra.mxu0 %v2146
  %2157 = vmatpush.msra.mxu0 %v2145
  %2158 = vmatpush.msra.mxu0 %v2144
  %2159 = vmatpush.msra.mxu0 %v2143
  %2160 = vmatpush.msra.mxu0 %v2142
  %2161 = vmatpush.msra.mxu0 %v2141
  %2162 = vmatpush.msra.mxu0 %v2140
  %2163 = vmatpush.msra.mxu0 %v2139
  %2164 = vmatpush.msra.mxu0 %v2138
  %2165 = vmatpush.msra.mxu0 %v2137
  %2166 = vmatmul.f32.gmra.mxu0 %v2148
  %v2167 = vpop.f32.mrf.mxu0
  %v2168 = vadd.f32 0.0, %v2167
  %2169 = vdwg.mxu0
  %v2170 = vadd.f32 %v2135, %v2168
  %v2171 = vld [vmem:[%s6] sm:$0x1]
  %v2173 = vperm.slane %v2171, 0
  %v2175 = vadd.f32 %v2170, %v2173
  %v2176 = vmax.f32 %v2175, 0.0
  %v2177 = vld [vmem:[%s7] sm:$0xff]
  %v2178 = vld [vmem:[%s7 + $0x8] sm:$0xff]
  %v2179 = vld [vmem:[%s7 + $0x10] sm:$0xff]
  %v2180 = vld [vmem:[%s7 + $0x18] sm:$0xff]
  %v2181 = vld [vmem:[%s7 + $0x20] sm:$0xff]
  %v2182 = vld [vmem:[%s7 + $0x28] sm:$0xff]
  %v2183 = vld [vmem:[%s7 + $0x30] sm:$0x3]
  %v2184 = vld [vmem:[%s8] sm:$0x1]
  %v2186 = vperm.slane %v2184, 0
  %vm2188 = vcmask 408576
  %v2190 = vsel %vm2188, %v2176, 0
  %vm2192 = vcmask 1041408
  %v2194 = vsel %vm2192, %v2183, 0
  %2196 = vmatpush.msra.mxu0 0.0
  %2197 = vmatpush.msra.mxu0 0.0
  %2198 = vmatpush.msra.mxu0 0.0
  %2199 = vmatpush.msra.mxu0 0.0
  %2200 = vmatpush.msra.mxu0 0.0
  %2201 = vmatpush.msra.mxu0 0.0
  %2202 = vmatpush.msra.mxu0 0.0
  %2203 = vmatpush.msra.mxu0 0.0
  %2204 = vmatpush.msra.mxu0 0.0
  %2205 = vmatpush.msra.mxu0 %v2194
  %2206 = vmatpush.msra.mxu0 %v2182
  %2207 = vmatpush.msra.mxu0 %v2181
  %2208 = vmatpush.msra.mxu0 %v2180
  %2209 = vmatpush.msra.mxu0 %v2179
  %2210 = vmatpush.msra.mxu0 %v2178
  %2211 = vmatpush.msra.mxu0 %v2177
  %2212 = vmatmul.f32.gmra.mxu0 %v2190
  %v2213 = vpop.f32.mrf.mxu0
  %v2214 = vadd.f32 %v2186, %v2213
  %2215 = vdwg.mxu0
  %vm2216 = vcmask 80896
  %v2217 = vsel %vm2216, %v2214, -inf
  %2218 = vmax.xlane.f32.xlu0 %v2217
  %v2219 = vpop.xlane.xlu0 %2218
  %v2220 = vsub.f32 %v2214, %v2219
  %v2221 = vmul.f32 %v2220, 1.442695
  %v2222 = vpow.pop %v2221
  %v2223 = vsel %vm2216, %v2222, 0.0
  %2224 = vadd.xlane.f32.xlu0 %v2223
  %v2225 = vpop.xlane.xlu0 %2224
  %v2226 = vlog2.pop %v2225
  %v2227 = vmul.f32 %v2226, 0.6931472
  %v2228 = vsub.f32 %v2220, %v2227
  %2229 = vst.msk [vmem:[%s9] sm:$0xff] %vm2216, %v2228
  // Predicated region
  $region38: #{net_forward.1} parent=0 // pred_check
    _
  $region39: #{net_forward.1} parent=0 // pred_check_branch
    %2231 = sbr.rel (0) target = $region41
  $region40: #{net_forward.1} parent=0 // pred_region
    _
  $region41: #{net_forward.1} parent=0 // pred_fallthru
    _
  // Predicated region
  $region42: #{net_forward.1} parent=0 // pred_check
    _
  $region43: #{net_forward.1} parent=0 // pred_check_branch
    %2233 = sbr.rel (0) target = $region45
  $region44: #{net_forward.1} parent=0 // pred_region
    _
  $region45: #{net_forward.1} parent=0 // pred_fallthru
    _

</llo_original>
